<compile_context>
chip_gen: v7x
topology: tpu7x:2x2x1
jax: 0.10.0
libtpu: 0.0.40
codegen_flags: <defaults>
</compile_context>

<pallas_src>
import functools

import jax
import jax.numpy as jnp
from jax.experimental import pallas as pl
from jax.experimental.pallas import tpu as pltpu


def _layernorm(v, gamma, beta, eps=1e-5):
    # Two-pass variance (E[(x-mean)^2]) in f32 for numerical robustness.
    mean = jnp.mean(v, axis=-1, keepdims=True)
    centered = v - mean
    var = jnp.mean(centered * centered, axis=-1, keepdims=True)
    return centered * jax.lax.rsqrt(var + eps) * gamma + beta


def encoder_layer_kernel(
    x_ref,                    # (1, N, C)  f32   current batch element
    ln0_g_ref, ln0_b_ref,     # (1, C) f32       pre_norm
    wq_ref, wk_ref, wv_ref,   # (H, C, hd) bf16  head-major qkv weights (scale folded into Wq)
    wo_ref,                   # (H, hd, C) bf16  head-major proj weight
    bproj_ref,                # (1, C) f32
    ln1_g_ref, ln1_b_ref,     # (1, C) f32       norm1
    w1_ref, b1_ref,           # (C, tf) bf16, (1, tf) f32
    w2_ref, b2_ref,           # (tf, C) bf16, (1, C) f32
    o_ref,                    # (1, N, C) f32
    srcn_ref,                 # (N, C) f32 scratch: norm1(src) kept across the F sweep
    *, num_heads,
):
    f = pl.program_id(1)
    bf16 = jnp.bfloat16
    f32 = jnp.float32

    # ---- attention + residual + norm1: only once per batch element (f == 0) ----------------
    @pl.when(f == 0)
    def _attention():
        x = x_ref[0]                                           # (N, C) f32
        N, C = x.shape
        H = num_heads

        xn = _layernorm(x, ln0_g_ref[...], ln0_b_ref[...])
        xnb = xn.astype(bf16)
        xh = jnp.broadcast_to(xnb[None], (H, N, C))            # head-batched activations

        # Per-head projections, batched over the leading head axis (single dot_generals).
        q = jnp.einsum('hnc,hcd->hnd', xh, wq_ref[...], preferred_element_type=f32)
        k = jnp.einsum('hnc,hcd->hnd', xh, wk_ref[...], preferred_element_type=f32)
        v = jnp.einsum('hnc,hcd->hnd', xh, wv_ref[...], preferred_element_type=f32)

        # Scores (scale already folded into Wq in the wrapper).
        s = jnp.einsum('hnd,hmd->hnm', q.astype(bf16), k.astype(bf16),
                       preferred_element_type=f32)             # (H, N, N)
        s = s - jnp.max(s, axis=-1, keepdims=True)
        p = jnp.exp(s)
        denom = jnp.sum(p, axis=-1, keepdims=True)             # (H, N, 1)

        # PV with un-normalized p; normalize the (much smaller) context afterwards.
        ctx = jnp.einsum('hnm,hmd->hnd', p.astype(bf16), v.astype(bf16),
                         preferred_element_type=f32)           # (H, N, hd)
        ctx = ctx * pl.reciprocal(denom, approx=True)
        ctxb = ctx.astype(bf16)

        # Output projection: accumulate per head into one (N, C) f32 value
        # (== concat(heads) @ Wproj, no (H, N, C) materialization, full-width output columns).
        attn = jnp.dot(ctxb[0], wo_ref[0], preferred_element_type=f32)
        for h in range(1, H):
            attn = attn + jnp.dot(ctxb[h], wo_ref[h], preferred_element_type=f32)
        attn = attn + bproj_ref[...]

        # TODO(synk): attn_drop / proj_drop / dropout1/2 / DropPath are identity at inference;
        # training-mode RNG dropout is not implemented.
        src = x + attn
        srcn_ref[...] = _layernorm(src, ln1_g_ref[...], ln1_b_ref[...])

    # ---- MLP: one feedforward block per F step, accumulated into the resident output -------
    srcn = srcn_ref[...]                                        # (N, C) f32
    h1 = jnp.dot(srcn.astype(bf16), w1_ref[...], preferred_element_type=f32) + b1_ref[...]
    h1 = jax.nn.gelu(h1, approximate=True)                      # tanh GELU -> EUP
    y2 = jnp.dot(h1.astype(bf16), w2_ref[...], preferred_element_type=f32)   # (N, C)

    @pl.when(f == 0)
    def _init_out():
        o_ref[0] = srcn + y2 + b2_ref[...]

    @pl.when(f > 0)
    def _acc_out():
        o_ref[0] = o_ref[0] + y2


def transformer_encoder_layer(x, params, *, num_heads, ff_block=None):
    B, N, C = x.shape
    F = params["w1"].shape[1]
    H = num_heads
    hd = C // H
    scale = hd ** (-0.5)
    tf = F if ff_block is None else ff_block
    assert F % tf == 0
    nf = F // tf
    f32, bf16 = jnp.float32, jnp.bfloat16

    # Wrapper-side (free XLA) rearrangement into head-major weights; NO batch tiling.
    wqkv = params["wqkv"]                                       # (C, 3C), cols = [q|k|v] x (H, hd)

    def head_major(w_cols, s=1.0):                              # (C, C) -> (H, C, hd) bf16
        return (w_cols.reshape(C, H, hd).transpose(1, 0, 2) * s).astype(bf16)

    wq_h = head_major(wqkv[:, 0 * C:1 * C], scale)              # attention scale folded in
    wk_h = head_major(wqkv[:, 1 * C:2 * C])
    wv_h = head_major(wqkv[:, 2 * C:3 * C])
    wo_h = params["wproj"].reshape(H, hd, C).astype(bf16)
    w1 = params["w1"].astype(bf16)
    w2 = params["w2"].astype(bf16)

    def const_spec(shape):                                      # constant-index (fetched once)
        nd = len(shape)
        return pl.BlockSpec(shape, lambda b, f, _nd=nd: (0,) * _nd)

    kernel = functools.partial(encoder_layer_kernel, num_heads=H)

    return pl.pallas_call(
        kernel,
        out_shape=jax.ShapeDtypeStruct((B, N, C), f32),
        grid=(B, nf),
        in_specs=[
            pl.BlockSpec((1, N, C), lambda b, f: (b, 0, 0)),    # x (one batch element / step)
            const_spec((1, C)), const_spec((1, C)),             # pre_norm gamma/beta
            const_spec((H, C, hd)), const_spec((H, C, hd)), const_spec((H, C, hd)),  # Wq/Wk/Wv
            const_spec((H, hd, C)),                             # Wproj (head-major)
            const_spec((1, C)),                                 # proj bias
            const_spec((1, C)), const_spec((1, C)),             # norm1 gamma/beta
            pl.BlockSpec((C, tf), lambda b, f: (0, f)),         # linear1 weight block
            pl.BlockSpec((1, tf), lambda b, f: (0, f)),         # linear1 bias block
            pl.BlockSpec((tf, C), lambda b, f: (f, 0)),         # linear2 weight block
            const_spec((1, C)),                                 # linear2 bias
        ],
        out_specs=pl.BlockSpec((1, N, C), lambda b, f: (b, 0, 0)),
        scratch_shapes=[pltpu.VMEM((N, C), jnp.float32)],       # norm1(src), resident over F
        compiler_params=pltpu.CompilerParams(
            dimension_semantics=("parallel", "arbitrary"),
            vmem_limit_bytes=48 * 1024 * 1024,
        ),
    )(
        x.astype(f32),
        params["ln0_g"], params["ln0_b"],
        wq_h, wk_h, wv_h, wo_h,
        params["bproj"],
        params["ln1_g"], params["ln1_b"],
        w1, params["b1"],
        w2, params["b2"],
    )


def reference_layer(x, params, *, num_heads):
    """Pure-JAX f32 reference of the PyTorch forward pass (exact erf GELU)."""
    B, N, C = x.shape
    hd = C // num_heads
    scale = hd ** (-0.5)

    def ln(v, g, b):
        mu = jnp.mean(v, axis=-1, keepdims=True)
        var = jnp.mean((v - mu) ** 2, axis=-1, keepdims=True)
        return (v - mu) / jnp.sqrt(var + 1e-5) * g + b

    xn = ln(x, params["ln0_g"], params["ln0_b"])
    qkv = xn @ params["wqkv"]                                    # (B, N, 3C)
    qkv = qkv.reshape(B, N, 3, num_heads, hd).transpose(2, 0, 3, 1, 4)
    q, k, v = qkv[0], qkv[1], qkv[2]                             # (B, H, N, hd)
    attn = jnp.einsum("bhnd,bhmd->bhnm", q, k) * scale
    attn = jax.nn.softmax(attn, axis=-1)
    ctx = jnp.einsum("bhnm,bhmd->bhnd", attn, v)
    ctx = ctx.transpose(0, 2, 1, 3).reshape(B, N, C)
    attn_out = ctx @ params["wproj"] + params["bproj"]

    src = x + attn_out
    srcn = ln(src, params["ln1_g"], params["ln1_b"])
    h = srcn @ params["w1"] + params["b1"]
    h = 0.5 * h * (1.0 + jax.lax.erf(h / jnp.sqrt(2.0)))
    src2 = h @ params["w2"] + params["b2"]
    return srcn + src2


if __name__ == "__main__":
    # Small shapes consistent with the module: d_model=32, nhead=4, ff=64, seq=8, batch=2.
    B, N, C = 2, 8, 32
    num_heads = 4
    F = 64

    key = jax.random.PRNGKey(0)
    ks = jax.random.split(key, 10)

    params = {
        "ln0_g": 1.0 + 0.1 * jax.random.normal(ks[0], (1, C), jnp.float32),
        "ln0_b": 0.1 * jax.random.normal(ks[1], (1, C), jnp.float32),
        # Linear weights stored transposed (in_features, out_features) so y = x @ W + b.
        "wqkv": 0.05 * jax.random.normal(ks[2], (C, 3 * C), jnp.float32),
        "wproj": 0.05 * jax.random.normal(ks[3], (C, C), jnp.float32),
        "bproj": 0.05 * jax.random.normal(ks[4], (1, C), jnp.float32),
        "ln1_g": 1.0 + 0.1 * jax.random.normal(ks[5], (1, C), jnp.float32),
        "ln1_b": 0.1 * jax.random.normal(ks[6], (1, C), jnp.float32),
        "w1": 0.05 * jax.random.normal(ks[7], (C, F), jnp.float32),
        "b1": 0.05 * jax.random.normal(ks[8], (1, F), jnp.float32),
        "w2": 0.05 * jax.random.normal(ks[9], (F, C), jnp.float32),
        "b2": jnp.zeros((1, C), jnp.float32),
    }

    x = jax.random.normal(jax.random.PRNGKey(42), (B, N, C), jnp.float32)

    out = transformer_encoder_layer(x, params, num_heads=num_heads)
    out = jax.block_until_ready(out)

    ref = reference_layer(x, params, num_heads=num_heads)
    assert out.shape == (B, N, C)
    # bf16 matmuls + approx reciprocal + tanh GELU vs f32/erf reference -> loosened tolerance.
    assert jnp.allclose(out, ref, atol=2e-2, rtol=2e-2), (
        "mismatch vs. JAX reference; max abs err = %f" % float(jnp.max(jnp.abs(out - ref))))

    print("KERNEL_OK")
</pallas_src>

<mosaic_0001>
module attributes {stable_mosaic.version = 11 : i64} {
  func.func @encoder_layer_kernel(%arg0: i32, %arg1: i32, %arg2: memref<1x8x32xf32, #tpu.memory_space<vmem>>, %arg3: memref<1x32xf32, #tpu.memory_space<vmem>>, %arg4: memref<1x32xf32, #tpu.memory_space<vmem>>, %arg5: memref<4x32x8xbf16, #tpu.memory_space<vmem>>, %arg6: memref<4x32x8xbf16, #tpu.memory_space<vmem>>, %arg7: memref<4x32x8xbf16, #tpu.memory_space<vmem>>, %arg8: memref<4x8x32xbf16, #tpu.memory_space<vmem>>, %arg9: memref<1x32xf32, #tpu.memory_space<vmem>>, %arg10: memref<1x32xf32, #tpu.memory_space<vmem>>, %arg11: memref<1x32xf32, #tpu.memory_space<vmem>>, %arg12: memref<32x64xbf16, #tpu.memory_space<vmem>>, %arg13: memref<1x64xf32, #tpu.memory_space<vmem>>, %arg14: memref<64x32xbf16, #tpu.memory_space<vmem>>, %arg15: memref<1x32xf32, #tpu.memory_space<vmem>>, %arg16: memref<1x8x32xf32, #tpu.memory_space<vmem>>, %arg17: memref<8x32xf32, #tpu.memory_space<vmem>>) attributes {dimension_semantics = [#tpu.dimension_semantics<parallel>, #tpu.dimension_semantics<arbitrary>], iteration_bounds = array<i64: 2, 1>, scalar_prefetch = 0 : i64, scratch_operands = 1 : i64, tpu.core_type = #tpu.core_type<tc>, window_params = [{transform_indices = @transform_0, window_bounds = array<i64: 1, 8, 32>}, {pipeline_mode = #tpu.pipeline_mode<synchronous>, transform_indices = @transform_1, window_bounds = array<i64: 1, 32>}, {pipeline_mode = #tpu.pipeline_mode<synchronous>, transform_indices = @transform_2, window_bounds = array<i64: 1, 32>}, {pipeline_mode = #tpu.pipeline_mode<synchronous>, transform_indices = @transform_3, window_bounds = array<i64: 4, 32, 8>}, {pipeline_mode = #tpu.pipeline_mode<synchronous>, transform_indices = @transform_4, window_bounds = array<i64: 4, 32, 8>}, {pipeline_mode = #tpu.pipeline_mode<synchronous>, transform_indices = @transform_5, window_bounds = array<i64: 4, 32, 8>}, {pipeline_mode = #tpu.pipeline_mode<synchronous>, transform_indices = @transform_6, window_bounds = array<i64: 4, 8, 32>}, {pipeline_mode = #tpu.pipeline_mode<synchronous>, transform_indices = @transform_7, window_bounds = array<i64: 1, 32>}, {pipeline_mode = #tpu.pipeline_mode<synchronous>, transform_indices = @transform_8, window_bounds = array<i64: 1, 32>}, {pipeline_mode = #tpu.pipeline_mode<synchronous>, transform_indices = @transform_9, window_bounds = array<i64: 1, 32>}, {transform_indices = @transform_10, window_bounds = array<i64: 32, 64>}, {transform_indices = @transform_11, window_bounds = array<i64: 1, 64>}, {transform_indices = @transform_12, window_bounds = array<i64: 64, 32>}, {pipeline_mode = #tpu.pipeline_mode<synchronous>, transform_indices = @transform_13, window_bounds = array<i64: 1, 32>}, {transform_indices = @transform_14, window_bounds = array<i64: 1, 8, 32>}]} {
    %c0_i32 = arith.constant 0 : i32
    %0 = arith.cmpi eq, %arg1, %c0_i32 : i32
    %1 = arith.extui %0 : i1 to i32
    %c0_i32_0 = arith.constant 0 : i32
    %2 = arith.cmpi ne, %1, %c0_i32_0 : i32
    scf.if %2 {
      %c0_17 = arith.constant 0 : index
      %c0_18 = arith.constant 0 : index
      %c0_19 = arith.constant 0 : index
      %32 = vector.load %arg2[%c0_17, %c0_18, %c0_19] : memref<1x8x32xf32, #tpu.memory_space<vmem>>, vector<1x8x32xf32>
      %33 = vector.shape_cast %32 : vector<1x8x32xf32> to vector<8x32xf32>
      %c0_20 = arith.constant 0 : index
      %c0_21 = arith.constant 0 : index
      %34 = vector.load %arg3[%c0_20, %c0_21] : memref<1x32xf32, #tpu.memory_space<vmem>>, vector<1x32xf32>
      %c0_22 = arith.constant 0 : index
      %c0_23 = arith.constant 0 : index
      %35 = vector.load %arg4[%c0_22, %c0_23] : memref<1x32xf32, #tpu.memory_space<vmem>>, vector<1x32xf32>
      %cst_24 = arith.constant dense<0.000000e+00> : vector<8xf32>
      %36 = vector.multi_reduction <add>, %33, %cst_24 [1] : vector<8x32xf32> to vector<8xf32>
      %37 = vector.shape_cast %36 : vector<8xf32> to vector<8x1xf32>
      %cst_25 = arith.constant 3.200000e+01 : f32
      %38 = vector.broadcast %cst_25 : f32 to vector<8x1xf32>
      %39 = arith.divf %37, %38 : vector<8x1xf32>
      %40 = vector.broadcast %39 : vector<8x1xf32> to vector<8x32xf32>
      %41 = arith.subf %33, %40 : vector<8x32xf32>
      %42 = arith.mulf %41, %41 : vector<8x32xf32>
      %cst_26 = arith.constant dense<0.000000e+00> : vector<8xf32>
      %43 = vector.multi_reduction <add>, %42, %cst_26 [1] : vector<8x32xf32> to vector<8xf32>
      %44 = vector.shape_cast %43 : vector<8xf32> to vector<8x1xf32>
      %cst_27 = arith.constant 3.200000e+01 : f32
      %45 = vector.broadcast %cst_27 : f32 to vector<8x1xf32>
      %46 = arith.divf %44, %45 : vector<8x1xf32>
      %cst_28 = arith.constant 9.99999974E-6 : f32
      %47 = vector.broadcast %cst_28 : f32 to vector<8x1xf32>
      %48 = arith.addf %46, %47 : vector<8x1xf32>
      %49 = math.rsqrt %48 : vector<8x1xf32>
      %50 = vector.broadcast %49 : vector<8x1xf32> to vector<8x32xf32>
      %51 = arith.mulf %41, %50 : vector<8x32xf32>
      %52 = vector.broadcast %34 : vector<1x32xf32> to vector<8x32xf32>
      %53 = arith.mulf %51, %52 : vector<8x32xf32>
      %54 = vector.broadcast %35 : vector<1x32xf32> to vector<8x32xf32>
      %55 = arith.addf %53, %54 : vector<8x32xf32>
      %56 = arith.truncf %55 : vector<8x32xf32> to vector<8x32xbf16>
      %57 = vector.shape_cast %56 : vector<8x32xbf16> to vector<1x8x32xbf16>
      %58 = vector.shape_cast %57 : vector<1x8x32xbf16> to vector<1x8x32xbf16>
      %59 = vector.broadcast %58 : vector<1x8x32xbf16> to vector<4x8x32xbf16>
      %c0_29 = arith.constant 0 : index
      %c0_30 = arith.constant 0 : index
      %c0_31 = arith.constant 0 : index
      %60 = vector.load %arg5[%c0_29, %c0_30, %c0_31] : memref<4x32x8xbf16, #tpu.memory_space<vmem>>, vector<4x32x8xbf16>
      "tpu.trace_start"() <{level = 10 : i32, message = "hnc,hcd->hnd"}> : () -> ()
      %cst_32 = arith.constant dense<0.000000e+00> : vector<4x8x8xf32>
      %61 = tpu.matmul %59, %60, %cst_32 {dimension_numbers = #tpu.dot_dimension_numbers<[2], [1], [1], [2], [0, 0, 0, 1, 1, 2], [0], [0]>} : vector<4x8x32xbf16>, vector<4x32x8xbf16>, vector<4x8x8xf32> -> vector<4x8x8xf32>
      "tpu.trace_stop"() : () -> ()
      %c0_33 = arith.constant 0 : index
      %c0_34 = arith.constant 0 : index
      %c0_35 = arith.constant 0 : index
      %62 = vector.load %arg6[%c0_33, %c0_34, %c0_35] : memref<4x32x8xbf16, #tpu.memory_space<vmem>>, vector<4x32x8xbf16>
      "tpu.trace_start"() <{level = 10 : i32, message = "hnc,hcd->hnd"}> : () -> ()
      %cst_36 = arith.constant dense<0.000000e+00> : vector<4x8x8xf32>
      %63 = tpu.matmul %59, %62, %cst_36 {dimension_numbers = #tpu.dot_dimension_numbers<[2], [1], [1], [2], [0, 0, 0, 1, 1, 2], [0], [0]>} : vector<4x8x32xbf16>, vector<4x32x8xbf16>, vector<4x8x8xf32> -> vector<4x8x8xf32>
      "tpu.trace_stop"() : () -> ()
      %c0_37 = arith.constant 0 : index
      %c0_38 = arith.constant 0 : index
      %c0_39 = arith.constant 0 : index
      %64 = vector.load %arg7[%c0_37, %c0_38, %c0_39] : memref<4x32x8xbf16, #tpu.memory_space<vmem>>, vector<4x32x8xbf16>
      "tpu.trace_start"() <{level = 10 : i32, message = "hnc,hcd->hnd"}> : () -> ()
      %cst_40 = arith.constant dense<0.000000e+00> : vector<4x8x8xf32>
      %65 = tpu.matmul %59, %64, %cst_40 {dimension_numbers = #tpu.dot_dimension_numbers<[2], [1], [1], [2], [0, 0, 0, 1, 1, 2], [0], [0]>} : vector<4x8x32xbf16>, vector<4x32x8xbf16>, vector<4x8x8xf32> -> vector<4x8x8xf32>
      "tpu.trace_stop"() : () -> ()
      %66 = arith.truncf %61 : vector<4x8x8xf32> to vector<4x8x8xbf16>
      %67 = arith.truncf %63 : vector<4x8x8xf32> to vector<4x8x8xbf16>
      "tpu.trace_start"() <{level = 10 : i32, message = "hnd,hmd->hnm"}> : () -> ()
      %cst_41 = arith.constant dense<0.000000e+00> : vector<4x8x8xf32>
      %68 = tpu.matmul %66, %67, %cst_41 {dimension_numbers = #tpu.dot_dimension_numbers<[2], [2], [1], [1], [0, 0, 0, 1, 1, 1], [0], [0]>} : vector<4x8x8xbf16>, vector<4x8x8xbf16>, vector<4x8x8xf32> -> vector<4x8x8xf32>
      "tpu.trace_stop"() : () -> ()
      %cst_42 = arith.constant dense<0xFF800000> : vector<4x8xf32>
      %69 = vector.multi_reduction <maximumf>, %68, %cst_42 [2] : vector<4x8x8xf32> to vector<4x8xf32>
      %70 = vector.shape_cast %69 : vector<4x8xf32> to vector<4x8x1xf32>
      %71 = vector.broadcast %70 : vector<4x8x1xf32> to vector<4x8x8xf32>
      %72 = arith.subf %68, %71 : vector<4x8x8xf32>
      %73 = math.exp %72 : vector<4x8x8xf32>
      %cst_43 = arith.constant dense<0.000000e+00> : vector<4x8xf32>
      %74 = vector.multi_reduction <add>, %73, %cst_43 [2] : vector<4x8x8xf32> to vector<4x8xf32>
      %75 = vector.shape_cast %74 : vector<4x8xf32> to vector<4x8x1xf32>
      %76 = arith.truncf %73 : vector<4x8x8xf32> to vector<4x8x8xbf16>
      %77 = arith.truncf %65 : vector<4x8x8xf32> to vector<4x8x8xbf16>
      "tpu.trace_start"() <{level = 10 : i32, message = "hnm,hmd->hnd"}> : () -> ()
      %cst_44 = arith.constant dense<0.000000e+00> : vector<4x8x8xf32>
      %78 = tpu.matmul %76, %77, %cst_44 {dimension_numbers = #tpu.dot_dimension_numbers<[2], [1], [1], [2], [0, 0, 0, 1, 1, 2], [0], [0]>} : vector<4x8x8xbf16>, vector<4x8x8xbf16>, vector<4x8x8xf32> -> vector<4x8x8xf32>
      "tpu.trace_stop"() : () -> ()
      %79 = tpu.reciprocal %75 {approx = true} : vector<4x8x1xf32> -> vector<4x8x1xf32>
      %80 = vector.broadcast %79 : vector<4x8x1xf32> to vector<4x8x8xf32>
      %81 = arith.mulf %78, %80 : vector<4x8x8xf32>
      %82 = arith.truncf %81 : vector<4x8x8xf32> to vector<4x8x8xbf16>
      %83 = vector.extract_strided_slice %82 {offsets = [0, 0, 0], sizes = [1, 8, 8], strides = [1, 1, 1]} : vector<4x8x8xbf16> to vector<1x8x8xbf16>
      %84 = vector.shape_cast %83 : vector<1x8x8xbf16> to vector<8x8xbf16>
      %c0_45 = arith.constant 0 : index
      %c0_46 = arith.constant 0 : index
      %c0_47 = arith.constant 0 : index
      %85 = vector.load %arg8[%c0_45, %c0_46, %c0_47] : memref<4x8x32xbf16, #tpu.memory_space<vmem>>, vector<1x8x32xbf16>
      %86 = vector.shape_cast %85 : vector<1x8x32xbf16> to vector<8x32xbf16>
      %cst_48 = arith.constant dense<0.000000e+00> : vector<8x32xf32>
      %87 = tpu.matmul %84, %86, %cst_48 {dimension_numbers = #tpu.dot_dimension_numbers<[1], [0], [0], [1], [0, 0, 1, 1], [], []>} : vector<8x8xbf16>, vector<8x32xbf16>, vector<8x32xf32> -> vector<8x32xf32>
      %88 = vector.extract_strided_slice %82 {offsets = [1, 0, 0], sizes = [1, 8, 8], strides = [1, 1, 1]} : vector<4x8x8xbf16> to vector<1x8x8xbf16>
      %89 = vector.shape_cast %88 : vector<1x8x8xbf16> to vector<8x8xbf16>
      %c1 = arith.constant 1 : index
      %c0_49 = arith.constant 0 : index
      %c0_50 = arith.constant 0 : index
      %90 = vector.load %arg8[%c1, %c0_49, %c0_50] : memref<4x8x32xbf16, #tpu.memory_space<vmem>>, vector<1x8x32xbf16>
      %91 = vector.shape_cast %90 : vector<1x8x32xbf16> to vector<8x32xbf16>
      %cst_51 = arith.constant dense<0.000000e+00> : vector<8x32xf32>
      %92 = tpu.matmul %89, %91, %cst_51 {dimension_numbers = #tpu.dot_dimension_numbers<[1], [0], [0], [1], [0, 0, 1, 1], [], []>} : vector<8x8xbf16>, vector<8x32xbf16>, vector<8x32xf32> -> vector<8x32xf32>
      %93 = arith.addf %87, %92 : vector<8x32xf32>
      %94 = vector.extract_strided_slice %82 {offsets = [2, 0, 0], sizes = [1, 8, 8], strides = [1, 1, 1]} : vector<4x8x8xbf16> to vector<1x8x8xbf16>
      %95 = vector.shape_cast %94 : vector<1x8x8xbf16> to vector<8x8xbf16>
      %c2 = arith.constant 2 : index
      %c0_52 = arith.constant 0 : index
      %c0_53 = arith.constant 0 : index
      %96 = vector.load %arg8[%c2, %c0_52, %c0_53] : memref<4x8x32xbf16, #tpu.memory_space<vmem>>, vector<1x8x32xbf16>
      %97 = vector.shape_cast %96 : vector<1x8x32xbf16> to vector<8x32xbf16>
      %cst_54 = arith.constant dense<0.000000e+00> : vector<8x32xf32>
      %98 = tpu.matmul %95, %97, %cst_54 {dimension_numbers = #tpu.dot_dimension_numbers<[1], [0], [0], [1], [0, 0, 1, 1], [], []>} : vector<8x8xbf16>, vector<8x32xbf16>, vector<8x32xf32> -> vector<8x32xf32>
      %99 = arith.addf %93, %98 : vector<8x32xf32>
      %100 = vector.extract_strided_slice %82 {offsets = [3, 0, 0], sizes = [1, 8, 8], strides = [1, 1, 1]} : vector<4x8x8xbf16> to vector<1x8x8xbf16>
      %101 = vector.shape_cast %100 : vector<1x8x8xbf16> to vector<8x8xbf16>
      %c3 = arith.constant 3 : index
      %c0_55 = arith.constant 0 : index
      %c0_56 = arith.constant 0 : index
      %102 = vector.load %arg8[%c3, %c0_55, %c0_56] : memref<4x8x32xbf16, #tpu.memory_space<vmem>>, vector<1x8x32xbf16>
      %103 = vector.shape_cast %102 : vector<1x8x32xbf16> to vector<8x32xbf16>
      %cst_57 = arith.constant dense<0.000000e+00> : vector<8x32xf32>
      %104 = tpu.matmul %101, %103, %cst_57 {dimension_numbers = #tpu.dot_dimension_numbers<[1], [0], [0], [1], [0, 0, 1, 1], [], []>} : vector<8x8xbf16>, vector<8x32xbf16>, vector<8x32xf32> -> vector<8x32xf32>
      %105 = arith.addf %99, %104 : vector<8x32xf32>
      %c0_58 = arith.constant 0 : index
      %c0_59 = arith.constant 0 : index
      %106 = vector.load %arg9[%c0_58, %c0_59] : memref<1x32xf32, #tpu.memory_space<vmem>>, vector<1x32xf32>
      %107 = vector.broadcast %106 : vector<1x32xf32> to vector<8x32xf32>
      %108 = arith.addf %105, %107 : vector<8x32xf32>
      %109 = arith.addf %33, %108 : vector<8x32xf32>
      %c0_60 = arith.constant 0 : index
      %c0_61 = arith.constant 0 : index
      %110 = vector.load %arg10[%c0_60, %c0_61] : memref<1x32xf32, #tpu.memory_space<vmem>>, vector<1x32xf32>
      %c0_62 = arith.constant 0 : index
      %c0_63 = arith.constant 0 : index
      %111 = vector.load %arg11[%c0_62, %c0_63] : memref<1x32xf32, #tpu.memory_space<vmem>>, vector<1x32xf32>
      %cst_64 = arith.constant dense<0.000000e+00> : vector<8xf32>
      %112 = vector.multi_reduction <add>, %109, %cst_64 [1] : vector<8x32xf32> to vector<8xf32>
      %113 = vector.shape_cast %112 : vector<8xf32> to vector<8x1xf32>
      %cst_65 = arith.constant 3.200000e+01 : f32
      %114 = vector.broadcast %cst_65 : f32 to vector<8x1xf32>
      %115 = arith.divf %113, %114 : vector<8x1xf32>
      %116 = vector.broadcast %115 : vector<8x1xf32> to vector<8x32xf32>
      %117 = arith.subf %109, %116 : vector<8x32xf32>
      %118 = arith.mulf %117, %117 : vector<8x32xf32>
      %cst_66 = arith.constant dense<0.000000e+00> : vector<8xf32>
      %119 = vector.multi_reduction <add>, %118, %cst_66 [1] : vector<8x32xf32> to vector<8xf32>
      %120 = vector.shape_cast %119 : vector<8xf32> to vector<8x1xf32>
      %cst_67 = arith.constant 3.200000e+01 : f32
      %121 = vector.broadcast %cst_67 : f32 to vector<8x1xf32>
      %122 = arith.divf %120, %121 : vector<8x1xf32>
      %cst_68 = arith.constant 9.99999974E-6 : f32
      %123 = vector.broadcast %cst_68 : f32 to vector<8x1xf32>
      %124 = arith.addf %122, %123 : vector<8x1xf32>
      %125 = math.rsqrt %124 : vector<8x1xf32>
      %126 = vector.broadcast %125 : vector<8x1xf32> to vector<8x32xf32>
      %127 = arith.mulf %117, %126 : vector<8x32xf32>
      %128 = vector.broadcast %110 : vector<1x32xf32> to vector<8x32xf32>
      %129 = arith.mulf %127, %128 : vector<8x32xf32>
      %130 = vector.broadcast %111 : vector<1x32xf32> to vector<8x32xf32>
      %131 = arith.addf %129, %130 : vector<8x32xf32>
      %c0_69 = arith.constant 0 : index
      %c0_70 = arith.constant 0 : index
      %132 = vector.load %arg17[%c0_69, %c0_70] : memref<8x32xf32, #tpu.memory_space<vmem>>, vector<8x32xf32>
      tpu.vector_store %arg17[%c0_69, %c0_70], %131 {strides = array<i32>} : memref<8x32xf32, #tpu.memory_space<vmem>>, vector<8x32xf32>,
    } else {
    }
    %c0 = arith.constant 0 : index
    %c0_1 = arith.constant 0 : index
    %3 = vector.load %arg17[%c0, %c0_1] : memref<8x32xf32, #tpu.memory_space<vmem>>, vector<8x32xf32>
    %4 = arith.truncf %3 : vector<8x32xf32> to vector<8x32xbf16>
    %c0_2 = arith.constant 0 : index
    %c0_3 = arith.constant 0 : index
    %5 = vector.load %arg12[%c0_2, %c0_3] : memref<32x64xbf16, #tpu.memory_space<vmem>>, vector<32x64xbf16>
    %cst = arith.constant dense<0.000000e+00> : vector<8x64xf32>
    %6 = tpu.matmul %4, %5, %cst {dimension_numbers = #tpu.dot_dimension_numbers<[1], [0], [0], [1], [0, 0, 1, 1], [], []>} : vector<8x32xbf16>, vector<32x64xbf16>, vector<8x64xf32> -> vector<8x64xf32>
    %c0_4 = arith.constant 0 : index
    %c0_5 = arith.constant 0 : index
    %7 = vector.load %arg13[%c0_4, %c0_5] : memref<1x64xf32, #tpu.memory_space<vmem>>, vector<1x64xf32>
    %8 = vector.broadcast %7 : vector<1x64xf32> to vector<8x64xf32>
    %9 = arith.addf %6, %8 : vector<8x64xf32>
    %10 = arith.mulf %9, %9 : vector<8x64xf32>
    %11 = arith.mulf %9, %10 : vector<8x64xf32>
    %cst_6 = arith.constant 4.471500e-02 : f32
    %12 = vector.broadcast %cst_6 : f32 to vector<8x64xf32>
    %13 = arith.mulf %12, %11 : vector<8x64xf32>
    %14 = arith.addf %9, %13 : vector<8x64xf32>
    %cst_7 = arith.constant 0.797884583 : f32
    %15 = vector.broadcast %cst_7 : f32 to vector<8x64xf32>
    %16 = arith.mulf %15, %14 : vector<8x64xf32>
    %17 = math.tanh %16 : vector<8x64xf32>
    %cst_8 = arith.constant 1.000000e+00 : f32
    %18 = vector.broadcast %cst_8 : f32 to vector<8x64xf32>
    %19 = arith.addf %18, %17 : vector<8x64xf32>
    %cst_9 = arith.constant 5.000000e-01 : f32
    %20 = vector.broadcast %cst_9 : f32 to vector<8x64xf32>
    %21 = arith.mulf %20, %19 : vector<8x64xf32>
    %22 = arith.mulf %9, %21 : vector<8x64xf32>
    %23 = arith.truncf %22 : vector<8x64xf32> to vector<8x64xbf16>
    %c0_10 = arith.constant 0 : index
    %c0_11 = arith.constant 0 : index
    %24 = vector.load %arg14[%c0_10, %c0_11] : memref<64x32xbf16, #tpu.memory_space<vmem>>, vector<64x32xbf16>
    %cst_12 = arith.constant dense<0.000000e+00> : vector<8x32xf32>
    %25 = tpu.matmul %23, %24, %cst_12 {dimension_numbers = #tpu.dot_dimension_numbers<[1], [0], [0], [1], [0, 0, 1, 1], [], []>} : vector<8x64xbf16>, vector<64x32xbf16>, vector<8x32xf32> -> vector<8x32xf32>
    %c0_i32_13 = arith.constant 0 : i32
    %26 = arith.cmpi eq, %arg1, %c0_i32_13 : i32
    %27 = arith.extui %26 : i1 to i32
    %c0_i32_14 = arith.constant 0 : i32
    %28 = arith.cmpi ne, %27, %c0_i32_14 : i32
    scf.if %28 {
      %32 = arith.addf %3, %25 : vector<8x32xf32>
      %c0_17 = arith.constant 0 : index
      %c0_18 = arith.constant 0 : index
      %33 = vector.load %arg15[%c0_17, %c0_18] : memref<1x32xf32, #tpu.memory_space<vmem>>, vector<1x32xf32>
      %34 = vector.broadcast %33 : vector<1x32xf32> to vector<8x32xf32>
      %35 = arith.addf %32, %34 : vector<8x32xf32>
      %c0_19 = arith.constant 0 : index
      %c0_20 = arith.constant 0 : index
      %c0_21 = arith.constant 0 : index
      %36 = vector.load %arg16[%c0_19, %c0_20, %c0_21] : memref<1x8x32xf32, #tpu.memory_space<vmem>>, vector<1x8x32xf32>
      %37 = vector.shape_cast %36 : vector<1x8x32xf32> to vector<8x32xf32>
      %38 = vector.shape_cast %35 : vector<8x32xf32> to vector<1x8x32xf32>
      tpu.vector_store %arg16[%c0_19, %c0_20, %c0_21], %38 {strides = array<i32>} : memref<1x8x32xf32, #tpu.memory_space<vmem>>, vector<1x8x32xf32>,
    } else {
    }
    %c0_i32_15 = arith.constant 0 : i32
    %29 = arith.cmpi sgt, %arg1, %c0_i32_15 : i32
    %30 = arith.extui %29 : i1 to i32
    %c0_i32_16 = arith.constant 0 : i32
    %31 = arith.cmpi ne, %30, %c0_i32_16 : i32
    scf.if %31 {
      %c0_17 = arith.constant 0 : index
      %c0_18 = arith.constant 0 : index
      %c0_19 = arith.constant 0 : index
      %32 = vector.load %arg16[%c0_17, %c0_18, %c0_19] : memref<1x8x32xf32, #tpu.memory_space<vmem>>, vector<1x8x32xf32>
      %33 = vector.shape_cast %32 : vector<1x8x32xf32> to vector<8x32xf32>
      %34 = arith.addf %33, %25 : vector<8x32xf32>
      %c0_20 = arith.constant 0 : index
      %c0_21 = arith.constant 0 : index
      %c0_22 = arith.constant 0 : index
      %35 = vector.load %arg16[%c0_20, %c0_21, %c0_22] : memref<1x8x32xf32, #tpu.memory_space<vmem>>, vector<1x8x32xf32>
      %36 = vector.shape_cast %35 : vector<1x8x32xf32> to vector<8x32xf32>
      %37 = vector.shape_cast %34 : vector<8x32xf32> to vector<1x8x32xf32>
      tpu.vector_store %arg16[%c0_20, %c0_21, %c0_22], %37 {strides = array<i32>} : memref<1x8x32xf32, #tpu.memory_space<vmem>>, vector<1x8x32xf32>,
    } else {
    }
    return
  }
  func.func @transform_0(%arg0: i32, %arg1: i32) -> (i32, i32, i32) {
    %c0_i32 = arith.constant 0 : i32
    %c0_i32_0 = arith.constant 0 : i32
    %c0_i32_1 = arith.constant 0 : i32
    return %arg0, %c0_i32, %c0_i32_0 : i32, i32, i32
  }
  func.func @transform_1(%arg0: i32, %arg1: i32) -> (i32, i32) {
    %c0_i32 = arith.constant 0 : i32
    %c0_i32_0 = arith.constant 0 : i32
    %c0_i32_1 = arith.constant 0 : i32
    return %c0_i32, %c0_i32_0 : i32, i32
  }
  func.func @transform_2(%arg0: i32, %arg1: i32) -> (i32, i32) {
    %c0_i32 = arith.constant 0 : i32
    %c0_i32_0 = arith.constant 0 : i32
    %c0_i32_1 = arith.constant 0 : i32
    return %c0_i32, %c0_i32_0 : i32, i32
  }
  func.func @transform_3(%arg0: i32, %arg1: i32) -> (i32, i32, i32) {
    %c0_i32 = arith.constant 0 : i32
    %c0_i32_0 = arith.constant 0 : i32
    %c0_i32_1 = arith.constant 0 : i32
    %c0_i32_2 = arith.constant 0 : i32
    return %c0_i32, %c0_i32_0, %c0_i32_1 : i32, i32, i32
  }
  func.func @transform_4(%arg0: i32, %arg1: i32) -> (i32, i32, i32) {
    %c0_i32 = arith.constant 0 : i32
    %c0_i32_0 = arith.constant 0 : i32
    %c0_i32_1 = arith.constant 0 : i32
    %c0_i32_2 = arith.constant 0 : i32
    return %c0_i32, %c0_i32_0, %c0_i32_1 : i32, i32, i32
  }
  func.func @transform_5(%arg0: i32, %arg1: i32) -> (i32, i32, i32) {
    %c0_i32 = arith.constant 0 : i32
    %c0_i32_0 = arith.constant 0 : i32
    %c0_i32_1 = arith.constant 0 : i32
    %c0_i32_2 = arith.constant 0 : i32
    return %c0_i32, %c0_i32_0, %c0_i32_1 : i32, i32, i32
  }
  func.func @transform_6(%arg0: i32, %arg1: i32) -> (i32, i32, i32) {
    %c0_i32 = arith.constant 0 : i32
    %c0_i32_0 = arith.constant 0 : i32
    %c0_i32_1 = arith.constant 0 : i32
    %c0_i32_2 = arith.constant 0 : i32
    return %c0_i32, %c0_i32_0, %c0_i32_1 : i32, i32, i32
  }
  func.func @transform_7(%arg0: i32, %arg1: i32) -> (i32, i32) {
    %c0_i32 = arith.constant 0 : i32
    %c0_i32_0 = arith.constant 0 : i32
    %c0_i32_1 = arith.constant 0 : i32
    return %c0_i32, %c0_i32_0 : i32, i32
  }
  func.func @transform_8(%arg0: i32, %arg1: i32) -> (i32, i32) {
    %c0_i32 = arith.constant 0 : i32
    %c0_i32_0 = arith.constant 0 : i32
    %c0_i32_1 = arith.constant 0 : i32
    return %c0_i32, %c0_i32_0 : i32, i32
  }
  func.func @transform_9(%arg0: i32, %arg1: i32) -> (i32, i32) {
    %c0_i32 = arith.constant 0 : i32
    %c0_i32_0 = arith.constant 0 : i32
    %c0_i32_1 = arith.constant 0 : i32
    return %c0_i32, %c0_i32_0 : i32, i32
  }
  func.func @transform_10(%arg0: i32, %arg1: i32) -> (i32, i32) {
    %c0_i32 = arith.constant 0 : i32
    %c0_i32_0 = arith.constant 0 : i32
    return %c0_i32, %arg1 : i32, i32
  }
  func.func @transform_11(%arg0: i32, %arg1: i32) -> (i32, i32) {
    %c0_i32 = arith.constant 0 : i32
    %c0_i32_0 = arith.constant 0 : i32
    return %c0_i32, %arg1 : i32, i32
  }
  func.func @transform_12(%arg0: i32, %arg1: i32) -> (i32, i32) {
    %c0_i32 = arith.constant 0 : i32
    %c0_i32_0 = arith.constant 0 : i32
    return %arg1, %c0_i32 : i32, i32
  }
  func.func @transform_13(%arg0: i32, %arg1: i32) -> (i32, i32) {
    %c0_i32 = arith.constant 0 : i32
    %c0_i32_0 = arith.constant 0 : i32
    %c0_i32_1 = arith.constant 0 : i32
    return %c0_i32, %c0_i32_0 : i32, i32
  }
  func.func @transform_14(%arg0: i32, %arg1: i32) -> (i32, i32, i32) {
    %c0_i32 = arith.constant 0 : i32
    %c0_i32_0 = arith.constant 0 : i32
    %c0_i32_1 = arith.constant 0 : i32
    return %arg0, %c0_i32, %c0_i32_0 : i32, i32, i32
  }
}

</mosaic_0001>

<llo_original>
// kernel: tpu_custom_call.1
$region0: #{tpu_custom_call.1}
  #allocation0 [shape = 'u32[]', space=smem, size = 0x4, offset = 0x4, fixed_abs, tag = 'smem constant byte address 0x4 - core index']
  #allocation1 [shape = 'u32[144,128]{1,0:T(1,128)}', space=vmem, size = 0x12000, scoped, tag = 'internal scratch']
  #allocation2 [shape = 'f32[8,32]{1,0:T(8,128)}', space=vmem, size = 0x1000, scoped, tag = 'scratch operand']
  %s0 = inlined_call_operand.vmem [shape: f32[2,8,32], index: 0, kind: input, shape index: {}]
  %s1 = inlined_call_operand.vmem [shape: f32[1,32], index: 1, kind: input, shape index: {}]
  %s2 = inlined_call_operand.vmem [shape: f32[1,32], index: 2, kind: input, shape index: {}]
  %s3 = inlined_call_operand.vmem [shape: bf16[4,32,8], index: 3, kind: input, shape index: {}]
  %s4 = inlined_call_operand.vmem [shape: bf16[4,32,8], index: 4, kind: input, shape index: {}]
  %s5 = inlined_call_operand.vmem [shape: bf16[4,32,8], index: 5, kind: input, shape index: {}]
  %s6 = inlined_call_operand.vmem [shape: bf16[4,8,32], index: 6, kind: input, shape index: {}]
  %s7 = inlined_call_operand.vmem [shape: f32[1,32], index: 7, kind: input, shape index: {}]
  %s8 = inlined_call_operand.vmem [shape: f32[1,32], index: 8, kind: input, shape index: {}]
  %s9 = inlined_call_operand.vmem [shape: f32[1,32], index: 9, kind: input, shape index: {}]
  %s10 = inlined_call_operand.vmem [shape: bf16[32,64], index: 10, kind: input, shape index: {}]
  %s11 = inlined_call_operand.vmem [shape: f32[1,64], index: 11, kind: input, shape index: {}]
  %s12 = inlined_call_operand.vmem [shape: bf16[64,32], index: 12, kind: input, shape index: {}]
  %s13 = inlined_call_operand.vmem [shape: f32[1,32], index: 13, kind: input, shape index: {}]
  %s14 = inlined_call_operand.hbm [shape: f32[2,8,32], index: 14, kind: output, shape index: {}]
  %s15 = sld [smem:[#allocation0]]
  $region101: #{tpu_custom_call.1} parent=0
    _
  %s17 = ssub.s32 1, %s15
  %s18 = scalar_select 0, %s17, %s15
  $region1: #{tpu_custom_call.1} parent=0
    #allocation3 [shape = 'u8[8192]{0}', space=vmem, size = 0x2000, scoped, tag = 'output window, operand 0']
    #allocation4 [shape = 's32[2]{0}', space=sflag, size = 0x8, scoped, tag = 'scoped memory for tpu_custom_call.1']
    %19 = vsyncpa [#allocation4], 0
    %s20 = scalar_lea.sflag [#allocation4], 1
    %21 = vsyncpa %s20, 0
    loop: start=0, step=1, limit=4
    $region2: #{tpu_custom_call.1} parent=1 // loop_pre_header
      _
    $region3: #{tpu_custom_call.1} parent=1 // loop_header
      %s23 = sphi 0, %s27
      %p24 = scmp.ge.s32.totalorder %s23, 4
      %s30 = sphi 0, %s42
      %s31 = sphi 0, %s38
      %s32 = sphi 0, %s30
      %s33 = sphi 0, %s31
      %s34 = sphi 0, %s32
      %s35 = sphi 0, %s33
      %s45 = sphi 0, %s47
      %s48 = sphi 0, %s45
      %s49 = sphi 0, %s48
      %s65 = sphi 0, %s49
      %s69 = sphi 0, %s69
      %s71 = sphi 0, %s69
      %s72 = sphi 0, %s71
      %s86 = sphi 0, %s72
      %s90 = sphi 0, %s90
      %s92 = sphi 0, %s90
      %s93 = sphi 0, %s92
      %s107 = sphi 0, %s93
      %s111 = sphi 0, %s111
      %s113 = sphi 0, %s111
      %s114 = sphi 0, %s113
      %s128 = sphi 0, %s114
      %s132 = sphi 0, %s132
      %s134 = sphi 0, %s132
      %s135 = sphi 0, %s134
      %s149 = sphi 0, %s135
      %s153 = sphi 0, %s153
      %s155 = sphi 0, %s153
      %s156 = sphi 0, %s155
      %s170 = sphi 0, %s156
      %s174 = sphi 0, %s174
      %s176 = sphi 0, %s174
      %s177 = sphi 0, %s176
      %s191 = sphi 0, %s177
      %s195 = sphi 0, %s195
      %s197 = sphi 0, %s195
      %s198 = sphi 0, %s197
      %s212 = sphi 0, %s198
      %s216 = sphi 0, %s216
      %s218 = sphi 0, %s216
      %s219 = sphi 0, %s218
      %s233 = sphi 0, %s219
      %s237 = sphi 0, %s237
      %s239 = sphi 0, %s237
      %s240 = sphi 0, %s239
      %s254 = sphi 0, %s240
      %s260 = sphi 0, %s262
      %s263 = sphi 0, %s260
      %s264 = sphi 0, %s263
      %s280 = sphi 0, %s264
      %s286 = sphi 0, %s288
      %s289 = sphi 0, %s286
      %s290 = sphi 0, %s289
      %s306 = sphi 0, %s290
      %s312 = sphi 0, %s314
      %s315 = sphi 0, %s312
      %s316 = sphi 0, %s315
      %s332 = sphi 0, %s316
      %s336 = sphi 0, %s336
      %s338 = sphi 0, %s336
      %s339 = sphi 0, %s338
      %s353 = sphi 0, %s339
      %s359 = sphi 0, %s361
      %s362 = sphi 0, %s359
      %s363 = sphi 0, %s362
      %s379 = sphi 0, %s363
    $region4: #{tpu_custom_call.1} parent=1 // loop_header_branch
      %26 = sbr.rel (%p24) target = $region8
    $region5: #{tpu_custom_call.1} parent=1 // loop_body
      %s28 = ssub.s32 %s23, 1
      %s29 = ssub.s32 %s23, 2
      %s36 = sadd.s32 1, %s31
      %p37 = scmp.ge.s32.totalorder %s36, 1
      %s38 = scalar_select %p37, 0, %s36
      %s39 = sadd.s32 1, %s30
      %s40 = scalar_select %p37, %s39, %s30
      %p41 = scmp.ge.s32.totalorder %s40, 2
      %s42 = scalar_select %p41, 0, %s40
      %s43 = ssub.s32 %s30, %s42
      %p44 = scmp.eq.s32.totalorder %s43, 0
      %s46 = sadd.s32 %s45, 1
      %s47 = scalar_select %p44, %s45, %s46
      %p50 = pneg %p44
      %p51 = scmp.eq.s32.totalorder %s23, 1
      %p52 = por %p50, %p51
      %p53 = scmp.ne.s32.totalorder %s45, %s48
      %p54 = scmp.eq.s32.totalorder %s23, 0
      %p55 = por %p53, %p54
      %p56 = scmp.ne.s32.totalorder %s45, %s48
      %p57 = scmp.eq.s32.totalorder %s28, 1
      %p58 = por %p56, %p57
      %p59 = scmp.ne.s32.totalorder %s48, %s49
      %p60 = scmp.eq.s32.totalorder %s28, 0
      %p61 = por %p59, %p60
      %p62 = scmp.ne.s32.totalorder %s48, %s49
      %p63 = scmp.eq.s32.totalorder %s29, 1
      %p64 = por %p62, %p63
      %p66 = scmp.ne.s32.totalorder %s49, %s65
      %p67 = scmp.eq.s32.totalorder %s29, 0
      %p68 = por %p66, %p67
      %s70 = sadd.s32 %s69, 1
      %p73 = scmp.eq.s32.totalorder %s23, 1
      %p74 = scmp.ne.s32.totalorder %s69, %s71
      %p75 = scmp.eq.s32.totalorder %s23, 0
      %p76 = por %p74, %p75
      %p77 = scmp.ne.s32.totalorder %s69, %s71
      %p78 = scmp.eq.s32.totalorder %s28, 1
      %p79 = por %p77, %p78
      %p80 = scmp.ne.s32.totalorder %s71, %s72
      %p81 = scmp.eq.s32.totalorder %s28, 0
      %p82 = por %p80, %p81
      %p83 = scmp.ne.s32.totalorder %s71, %s72
      %p84 = scmp.eq.s32.totalorder %s29, 1
      %p85 = por %p83, %p84
      %p87 = scmp.ne.s32.totalorder %s72, %s86
      %p88 = scmp.eq.s32.totalorder %s29, 0
      %p89 = por %p87, %p88
      %s91 = sadd.s32 %s90, 1
      %p94 = scmp.eq.s32.totalorder %s23, 1
      %p95 = scmp.ne.s32.totalorder %s90, %s92
      %p96 = scmp.eq.s32.totalorder %s23, 0
      %p97 = por %p95, %p96
      %p98 = scmp.ne.s32.totalorder %s90, %s92
      %p99 = scmp.eq.s32.totalorder %s28, 1
      %p100 = por %p98, %p99
      %p101 = scmp.ne.s32.totalorder %s92, %s93
      %p102 = scmp.eq.s32.totalorder %s28, 0
      %p103 = por %p101, %p102
      %p104 = scmp.ne.s32.totalorder %s92, %s93
      %p105 = scmp.eq.s32.totalorder %s29, 1
      %p106 = por %p104, %p105
      %p108 = scmp.ne.s32.totalorder %s93, %s107
      %p109 = scmp.eq.s32.totalorder %s29, 0
      %p110 = por %p108, %p109
      %s112 = sadd.s32 %s111, 1
      %p115 = scmp.eq.s32.totalorder %s23, 1
      %p116 = scmp.ne.s32.totalorder %s111, %s113
      %p117 = scmp.eq.s32.totalorder %s23, 0
      %p118 = por %p116, %p117
      %p119 = scmp.ne.s32.totalorder %s111, %s113
      %p120 = scmp.eq.s32.totalorder %s28, 1
      %p121 = por %p119, %p120
      %p122 = scmp.ne.s32.totalorder %s113, %s114
      %p123 = scmp.eq.s32.totalorder %s28, 0
      %p124 = por %p122, %p123
      %p125 = scmp.ne.s32.totalorder %s113, %s114
      %p126 = scmp.eq.s32.totalorder %s29, 1
      %p127 = por %p125, %p126
      %p129 = scmp.ne.s32.totalorder %s114, %s128
      %p130 = scmp.eq.s32.totalorder %s29, 0
      %p131 = por %p129, %p130
      %s133 = sadd.s32 %s132, 1
      %p136 = scmp.eq.s32.totalorder %s23, 1
      %p137 = scmp.ne.s32.totalorder %s132, %s134
      %p138 = scmp.eq.s32.totalorder %s23, 0
      %p139 = por %p137, %p138
      %p140 = scmp.ne.s32.totalorder %s132, %s134
      %p141 = scmp.eq.s32.totalorder %s28, 1
      %p142 = por %p140, %p141
      %p143 = scmp.ne.s32.totalorder %s134, %s135
      %p144 = scmp.eq.s32.totalorder %s28, 0
      %p145 = por %p143, %p144
      %p146 = scmp.ne.s32.totalorder %s134, %s135
      %p147 = scmp.eq.s32.totalorder %s29, 1
      %p148 = por %p146, %p147
      %p150 = scmp.ne.s32.totalorder %s135, %s149
      %p151 = scmp.eq.s32.totalorder %s29, 0
      %p152 = por %p150, %p151
      %s154 = sadd.s32 %s153, 1
      %p157 = scmp.eq.s32.totalorder %s23, 1
      %p158 = scmp.ne.s32.totalorder %s153, %s155
      %p159 = scmp.eq.s32.totalorder %s23, 0
      %p160 = por %p158, %p159
      %p161 = scmp.ne.s32.totalorder %s153, %s155
      %p162 = scmp.eq.s32.totalorder %s28, 1
      %p163 = por %p161, %p162
      %p164 = scmp.ne.s32.totalorder %s155, %s156
      %p165 = scmp.eq.s32.totalorder %s28, 0
      %p166 = por %p164, %p165
      %p167 = scmp.ne.s32.totalorder %s155, %s156
      %p168 = scmp.eq.s32.totalorder %s29, 1
      %p169 = por %p167, %p168
      %p171 = scmp.ne.s32.totalorder %s156, %s170
      %p172 = scmp.eq.s32.totalorder %s29, 0
      %p173 = por %p171, %p172
      %s175 = sadd.s32 %s174, 1
      %p178 = scmp.eq.s32.totalorder %s23, 1
      %p179 = scmp.ne.s32.totalorder %s174, %s176
      %p180 = scmp.eq.s32.totalorder %s23, 0
      %p181 = por %p179, %p180
      %p182 = scmp.ne.s32.totalorder %s174, %s176
      %p183 = scmp.eq.s32.totalorder %s28, 1
      %p184 = por %p182, %p183
      %p185 = scmp.ne.s32.totalorder %s176, %s177
      %p186 = scmp.eq.s32.totalorder %s28, 0
      %p187 = por %p185, %p186
      %p188 = scmp.ne.s32.totalorder %s176, %s177
      %p189 = scmp.eq.s32.totalorder %s29, 1
      %p190 = por %p188, %p189
      %p192 = scmp.ne.s32.totalorder %s177, %s191
      %p193 = scmp.eq.s32.totalorder %s29, 0
      %p194 = por %p192, %p193
      %s196 = sadd.s32 %s195, 1
      %p199 = scmp.eq.s32.totalorder %s23, 1
      %p200 = scmp.ne.s32.totalorder %s195, %s197
      %p201 = scmp.eq.s32.totalorder %s23, 0
      %p202 = por %p200, %p201
      %p203 = scmp.ne.s32.totalorder %s195, %s197
      %p204 = scmp.eq.s32.totalorder %s28, 1
      %p205 = por %p203, %p204
      %p206 = scmp.ne.s32.totalorder %s197, %s198
      %p207 = scmp.eq.s32.totalorder %s28, 0
      %p208 = por %p206, %p207
      %p209 = scmp.ne.s32.totalorder %s197, %s198
      %p210 = scmp.eq.s32.totalorder %s29, 1
      %p211 = por %p209, %p210
      %p213 = scmp.ne.s32.totalorder %s198, %s212
      %p214 = scmp.eq.s32.totalorder %s29, 0
      %p215 = por %p213, %p214
      %s217 = sadd.s32 %s216, 1
      %p220 = scmp.eq.s32.totalorder %s23, 1
      %p221 = scmp.ne.s32.totalorder %s216, %s218
      %p222 = scmp.eq.s32.totalorder %s23, 0
      %p223 = por %p221, %p222
      %p224 = scmp.ne.s32.totalorder %s216, %s218
      %p225 = scmp.eq.s32.totalorder %s28, 1
      %p226 = por %p224, %p225
      %p227 = scmp.ne.s32.totalorder %s218, %s219
      %p228 = scmp.eq.s32.totalorder %s28, 0
      %p229 = por %p227, %p228
      %p230 = scmp.ne.s32.totalorder %s218, %s219
      %p231 = scmp.eq.s32.totalorder %s29, 1
      %p232 = por %p230, %p231
      %p234 = scmp.ne.s32.totalorder %s219, %s233
      %p235 = scmp.eq.s32.totalorder %s29, 0
      %p236 = por %p234, %p235
      %s238 = sadd.s32 %s237, 1
      %p241 = scmp.eq.s32.totalorder %s23, 1
      %p242 = scmp.ne.s32.totalorder %s237, %s239
      %p243 = scmp.eq.s32.totalorder %s23, 0
      %p244 = por %p242, %p243
      %p245 = scmp.ne.s32.totalorder %s237, %s239
      %p246 = scmp.eq.s32.totalorder %s28, 1
      %p247 = por %p245, %p246
      %p248 = scmp.ne.s32.totalorder %s239, %s240
      %p249 = scmp.eq.s32.totalorder %s28, 0
      %p250 = por %p248, %p249
      %p251 = scmp.ne.s32.totalorder %s239, %s240
      %p252 = scmp.eq.s32.totalorder %s29, 1
      %p253 = por %p251, %p252
      %p255 = scmp.ne.s32.totalorder %s240, %s254
      %p256 = scmp.eq.s32.totalorder %s29, 0
      %p257 = por %p255, %p256
      %s258 = ssub.s32 %s31, %s38
      %p259 = scmp.eq.s32.totalorder %s258, 0
      %s261 = sadd.s32 %s260, 1
      %s262 = scalar_select %p259, %s260, %s261
      %p265 = pneg %p259
      %p266 = scmp.eq.s32.totalorder %s23, 1
      %p267 = por %p265, %p266
      %p268 = scmp.ne.s32.totalorder %s260, %s263
      %p269 = scmp.eq.s32.totalorder %s23, 0
      %p270 = por %p268, %p269
      %p271 = scmp.ne.s32.totalorder %s260, %s263
      %p272 = scmp.eq.s32.totalorder %s28, 1
      %p273 = por %p271, %p272
      %p274 = scmp.ne.s32.totalorder %s263, %s264
      %p275 = scmp.eq.s32.totalorder %s28, 0
      %p276 = por %p274, %p275
      %p277 = scmp.ne.s32.totalorder %s263, %s264
      %p278 = scmp.eq.s32.totalorder %s29, 1
      %p279 = por %p277, %p278
      %p281 = scmp.ne.s32.totalorder %s264, %s280
      %p282 = scmp.eq.s32.totalorder %s29, 0
      %p283 = por %p281, %p282
      %s284 = ssub.s32 %s31, %s38
      %p285 = scmp.eq.s32.totalorder %s284, 0
      %s287 = sadd.s32 %s286, 1
      %s288 = scalar_select %p285, %s286, %s287
      %p291 = pneg %p285
      %p292 = scmp.eq.s32.totalorder %s23, 1
      %p293 = por %p291, %p292
      %p294 = scmp.ne.s32.totalorder %s286, %s289
      %p295 = scmp.eq.s32.totalorder %s23, 0
      %p296 = por %p294, %p295
      %p297 = scmp.ne.s32.totalorder %s286, %s289
      %p298 = scmp.eq.s32.totalorder %s28, 1
      %p299 = por %p297, %p298
      %p300 = scmp.ne.s32.totalorder %s289, %s290
      %p301 = scmp.eq.s32.totalorder %s28, 0
      %p302 = por %p300, %p301
      %p303 = scmp.ne.s32.totalorder %s289, %s290
      %p304 = scmp.eq.s32.totalorder %s29, 1
      %p305 = por %p303, %p304
      %p307 = scmp.ne.s32.totalorder %s290, %s306
      %p308 = scmp.eq.s32.totalorder %s29, 0
      %p309 = por %p307, %p308
      %s310 = ssub.s32 %s31, %s38
      %p311 = scmp.eq.s32.totalorder %s310, 0
      %s313 = sadd.s32 %s312, 1
      %s314 = scalar_select %p311, %s312, %s313
      %p317 = pneg %p311
      %p318 = scmp.eq.s32.totalorder %s23, 1
      %p319 = por %p317, %p318
      %p320 = scmp.ne.s32.totalorder %s312, %s315
      %p321 = scmp.eq.s32.totalorder %s23, 0
      %p322 = por %p320, %p321
      %p323 = scmp.ne.s32.totalorder %s312, %s315
      %p324 = scmp.eq.s32.totalorder %s28, 1
      %p325 = por %p323, %p324
      %p326 = scmp.ne.s32.totalorder %s315, %s316
      %p327 = scmp.eq.s32.totalorder %s28, 0
      %p328 = por %p326, %p327
      %p329 = scmp.ne.s32.totalorder %s315, %s316
      %p330 = scmp.eq.s32.totalorder %s29, 1
      %p331 = por %p329, %p330
      %p333 = scmp.ne.s32.totalorder %s316, %s332
      %p334 = scmp.eq.s32.totalorder %s29, 0
      %p335 = por %p333, %p334
      %s337 = sadd.s32 %s336, 1
      %p340 = scmp.eq.s32.totalorder %s23, 1
      %p341 = scmp.ne.s32.totalorder %s336, %s338
      %p342 = scmp.eq.s32.totalorder %s23, 0
      %p343 = por %p341, %p342
      %p344 = scmp.ne.s32.totalorder %s336, %s338
      %p345 = scmp.eq.s32.totalorder %s28, 1
      %p346 = por %p344, %p345
      %p347 = scmp.ne.s32.totalorder %s338, %s339
      %p348 = scmp.eq.s32.totalorder %s28, 0
      %p349 = por %p347, %p348
      %p350 = scmp.ne.s32.totalorder %s338, %s339
      %p351 = scmp.eq.s32.totalorder %s29, 1
      %p352 = por %p350, %p351
      %p354 = scmp.ne.s32.totalorder %s339, %s353
      %p355 = scmp.eq.s32.totalorder %s29, 0
      %p356 = por %p354, %p355
      %s357 = ssub.s32 %s30, %s42
      %p358 = scmp.eq.s32.totalorder %s357, 0
      %s360 = sadd.s32 %s359, 1
      %s361 = scalar_select %p358, %s359, %s360
      %p364 = pneg %p358
      %p365 = scmp.eq.s32.totalorder %s23, 1
      %p366 = por %p364, %p365
      %p367 = scmp.ne.s32.totalorder %s359, %s362
      %p368 = scmp.eq.s32.totalorder %s23, 0
      %p369 = por %p367, %p368
      %p370 = scmp.ne.s32.totalorder %s359, %s362
      %p371 = scmp.eq.s32.totalorder %s28, 1
      %p372 = por %p370, %p371
      %p373 = scmp.ne.s32.totalorder %s362, %s363
      %p374 = scmp.eq.s32.totalorder %s28, 0
      %p375 = por %p373, %p374
      %p376 = scmp.ne.s32.totalorder %s362, %s363
      %p377 = scmp.eq.s32.totalorder %s29, 1
      %p378 = por %p376, %p377
      %p380 = scmp.ne.s32.totalorder %s363, %s379
      %p381 = scmp.eq.s32.totalorder %s29, 0
      %p382 = por %p380, %p381
      %p383 = scmp.le.s32.totalorder 1, %s23
      %p384 = scmp.lt.s32.totalorder %s23, 3
      %p385 = pnand %p383, %p384
      %p386 = pneg %p385
      // Predicated region
      $region9: #{tpu_custom_call.1} parent=5 // pred_check
        _
      $region10: #{tpu_custom_call.1} parent=5 // pred_check_branch
        %388 = sbr.rel (%p385) target = $region12
      $region11: #{tpu_custom_call.1} parent=5 // pred_region
        %s389 = ssub.s32 %s23, 1
        // Predicated region
        $region13: #{tpu_custom_call.1} parent=11 // pred_check
          %p390 = pneg %p82
        $region14: #{tpu_custom_call.1} parent=11 // pred_check_branch
          %392 = sbr.rel (%p390) target = $region16
        $region15: #{tpu_custom_call.1} parent=11 // pred_region
          _
        $region16: #{tpu_custom_call.1} parent=11 // pred_fallthru
          _
        // Predicated region
        $region17: #{tpu_custom_call.1} parent=11 // pred_check
          %p393 = pneg %p103
        $region18: #{tpu_custom_call.1} parent=11 // pred_check_branch
          %395 = sbr.rel (%p393) target = $region20
        $region19: #{tpu_custom_call.1} parent=11 // pred_region
          _
        $region20: #{tpu_custom_call.1} parent=11 // pred_fallthru
          _
        // Predicated region
        $region21: #{tpu_custom_call.1} parent=11 // pred_check
          %p396 = pneg %p124
        $region22: #{tpu_custom_call.1} parent=11 // pred_check_branch
          %398 = sbr.rel (%p396) target = $region24
        $region23: #{tpu_custom_call.1} parent=11 // pred_region
          _
        $region24: #{tpu_custom_call.1} parent=11 // pred_fallthru
          _
        // Predicated region
        $region25: #{tpu_custom_call.1} parent=11 // pred_check
          %p399 = pneg %p145
        $region26: #{tpu_custom_call.1} parent=11 // pred_check_branch
          %401 = sbr.rel (%p399) target = $region28
        $region27: #{tpu_custom_call.1} parent=11 // pred_region
          _
        $region28: #{tpu_custom_call.1} parent=11 // pred_fallthru
          _
        // Predicated region
        $region29: #{tpu_custom_call.1} parent=11 // pred_check
          %p402 = pneg %p166
        $region30: #{tpu_custom_call.1} parent=11 // pred_check_branch
          %404 = sbr.rel (%p402) target = $region32
        $region31: #{tpu_custom_call.1} parent=11 // pred_region
          _
        $region32: #{tpu_custom_call.1} parent=11 // pred_fallthru
          _
        // Predicated region
        $region33: #{tpu_custom_call.1} parent=11 // pred_check
          %p405 = pneg %p187
        $region34: #{tpu_custom_call.1} parent=11 // pred_check_branch
          %407 = sbr.rel (%p405) target = $region36
        $region35: #{tpu_custom_call.1} parent=11 // pred_region
          _
        $region36: #{tpu_custom_call.1} parent=11 // pred_fallthru
          _
        // Predicated region
        $region37: #{tpu_custom_call.1} parent=11 // pred_check
          %p408 = pneg %p208
        $region38: #{tpu_custom_call.1} parent=11 // pred_check_branch
          %410 = sbr.rel (%p408) target = $region40
        $region39: #{tpu_custom_call.1} parent=11 // pred_region
          _
        $region40: #{tpu_custom_call.1} parent=11 // pred_fallthru
          _
        // Predicated region
        $region41: #{tpu_custom_call.1} parent=11 // pred_check
          %p411 = pneg %p229
        $region42: #{tpu_custom_call.1} parent=11 // pred_check_branch
          %413 = sbr.rel (%p411) target = $region44
        $region43: #{tpu_custom_call.1} parent=11 // pred_region
          _
        $region44: #{tpu_custom_call.1} parent=11 // pred_fallthru
          _
        // Predicated region
        $region45: #{tpu_custom_call.1} parent=11 // pred_check
          %p414 = pneg %p250
        $region46: #{tpu_custom_call.1} parent=11 // pred_check_branch
          %416 = sbr.rel (%p414) target = $region48
        $region47: #{tpu_custom_call.1} parent=11 // pred_region
          _
        $region48: #{tpu_custom_call.1} parent=11 // pred_fallthru
          _
        // Predicated region
        $region49: #{tpu_custom_call.1} parent=11 // pred_check
          %p417 = pneg %p276
        $region50: #{tpu_custom_call.1} parent=11 // pred_check_branch
          %419 = sbr.rel (%p417) target = $region52
        $region51: #{tpu_custom_call.1} parent=11 // pred_region
          %p420 = scmp.lt.s32.totalorder %s33, 0
          %s421 = scalar_select %p420, %s33, 0
          %s422 = smul.addr %s421, 4
          %s423 = scalar_lea.vmem %s10, %s422
        $region52: #{tpu_custom_call.1} parent=11 // pred_fallthru
          _
        // Predicated region
        $region53: #{tpu_custom_call.1} parent=11 // pred_check
          %p424 = pneg %p302
        $region54: #{tpu_custom_call.1} parent=11 // pred_check_branch
          %426 = sbr.rel (%p424) target = $region56
        $region55: #{tpu_custom_call.1} parent=11 // pred_region
          %p427 = scmp.lt.s32.totalorder %s33, 0
          %s428 = scalar_select %p427, %s33, 0
          %s429 = scalar_lea.vmem %s11, %s428
        $region56: #{tpu_custom_call.1} parent=11 // pred_fallthru
          _
        // Predicated region
        $region57: #{tpu_custom_call.1} parent=11 // pred_check
          %p430 = pneg %p328
        $region58: #{tpu_custom_call.1} parent=11 // pred_check_branch
          %432 = sbr.rel (%p430) target = $region60
        $region59: #{tpu_custom_call.1} parent=11 // pred_region
          %s433 = smul.u32 8, %s33
          %p434 = scmp.lt.s32.totalorder %s433, 7
          %s435 = scalar_select %p434, %s433, 7
          %s436 = smul.addr %s435, 4
          %s437 = scalar_lea.vmem %s12, %s436
          %s438 = smul.u32 8, %s33
        $region60: #{tpu_custom_call.1} parent=11 // pred_fallthru
          _
        // Predicated region
        $region61: #{tpu_custom_call.1} parent=11 // pred_check
          %p439 = pneg %p349
        $region62: #{tpu_custom_call.1} parent=11 // pred_check_branch
          %441 = sbr.rel (%p439) target = $region64
        $region63: #{tpu_custom_call.1} parent=11 // pred_region
          _
        $region64: #{tpu_custom_call.1} parent=11 // pred_fallthru
          _
      $region12: #{tpu_custom_call.1} parent=5 // pred_fallthru
        _
      %p442 = scmp.lt.s32.totalorder %s23, 2
      // Predicated region
      $region65: #{tpu_custom_call.1} parent=5 // pred_check
        %p443 = pneg %p442
      $region66: #{tpu_custom_call.1} parent=5 // pred_check_branch
        %445 = sbr.rel (%p443) target = $region68
      $region67: #{tpu_custom_call.1} parent=5 // pred_region
        // Predicated region
        $region69: #{tpu_custom_call.1} parent=67 // pred_check
          %p446 = pneg %p55
        $region70: #{tpu_custom_call.1} parent=67 // pred_check_branch
          %448 = sbr.rel (%p446) target = $region72
        $region71: #{tpu_custom_call.1} parent=67 // pred_region
          %p449 = scmp.lt.s32.totalorder %s30, 1
          %s450 = scalar_select %p449, %s30, 1
          %s451 = smul.addr %s450, 8
          %s452 = scalar_lea.vmem %s0, %s451
        $region72: #{tpu_custom_call.1} parent=67 // pred_fallthru
          _
      $region68: #{tpu_custom_call.1} parent=5 // pred_fallthru
        _
      %p453 = scmp.le.s32.totalorder 1, %s23
      %p454 = scmp.lt.s32.totalorder %s23, 3
      %p455 = pnand %p453, %p454
      %p456 = pneg %p455
      // Predicated region
      $region73: #{tpu_custom_call.1} parent=5 // pred_check
        _
      $region74: #{tpu_custom_call.1} parent=5 // pred_check_branch
        %458 = sbr.rel (%p455) target = $region76
      $region75: #{tpu_custom_call.1} parent=5 // pred_region
        %s459 = ssub.s32 %s23, 1
        %p460 = scmp.lt.s32.totalorder %s32, 1
        %s461 = scalar_select %p460, %s32, 1
        %s462 = smul.addr %s461, 8
        %s463 = scalar_lea.vmem %s0, %s462
        %p464 = pneg %p61
        %p465 = pneg %p58
        %p466 = pneg %p82
        %p467 = pneg %p79
        %p468 = pneg %p103
        %p469 = pneg %p100
        %p470 = pneg %p124
        %p471 = pneg %p121
        %p472 = pneg %p145
        %p473 = pneg %p142
        %p474 = pneg %p166
        %p475 = pneg %p163
        %p476 = pneg %p187
        %p477 = pneg %p184
        %p478 = pneg %p208
        %p479 = pneg %p205
        %p480 = pneg %p229
        %p481 = pneg %p226
        %p482 = pneg %p250
        %p483 = pneg %p247
        %p484 = scmp.lt.s32.totalorder %s33, 0
        %s485 = scalar_select %p484, %s33, 0
        %s486 = smul.addr %s485, 4
        %s487 = scalar_lea.vmem %s10, %s486
        %p488 = pneg %p276
        %p489 = pneg %p273
        %p490 = scmp.lt.s32.totalorder %s33, 0
        %s491 = scalar_select %p490, %s33, 0
        %s492 = scalar_lea.vmem %s11, %s491
        %p493 = pneg %p302
        %p494 = pneg %p299
        %s495 = smul.u32 8, %s33
        %p496 = scmp.lt.s32.totalorder %s495, 7
        %s497 = scalar_select %p496, %s495, 7
        %s498 = smul.addr %s497, 4
        %s499 = scalar_lea.vmem %s12, %s498
        %p500 = pneg %p328
        %p501 = pneg %p325
        %p502 = pneg %p349
        %p503 = pneg %p346
        %p504 = pneg %p375
        %p505 = pneg %p372
        %s506 = sand.u32 %s362, 1
        %s507 = scalar_lea.sflag [#allocation4], %s506
        %s508 = sand.u32 %s362, 1
        %s509 = smul.addr %s508, 8
        %s510 = scalar_lea.vmem [#allocation3], %s509
        %p511 = scmp.lt.s32.totalorder %s32, 1
        %s512 = scalar_select %p511, %s32, 1
        %s513 = smul.addr %s512, 8
        %s514 = scalar_lea.vmem %s0, %s513
        %p515 = scmp.lt.s32.totalorder %s33, 0
        %s516 = scalar_select %p515, %s33, 0
        %s517 = smul.addr %s516, 4
        %s518 = scalar_lea.vmem %s10, %s517
        %p519 = scmp.lt.s32.totalorder %s33, 0
        %s520 = scalar_select %p519, %s33, 0
        %s521 = scalar_lea.vmem %s11, %s520
        %s522 = smul.u32 8, %s33
        %p523 = scmp.lt.s32.totalorder %s522, 7
        %s524 = scalar_select %p523, %s522, 7
        %s525 = smul.addr %s524, 4
        %s526 = scalar_lea.vmem %s12, %s525
        %s527 = smul.u32 8, %s33
        %p529 = scmp.eq.s32.totalorder %s33, 0
        // Predicated region
        $region77: #{tpu_custom_call.1} parent=75 // pred_check
          %p530 = pneg %p529
        $region78: #{tpu_custom_call.1} parent=75 // pred_check_branch
          %532 = sbr.rel (%p530) target = $region80
        $region79: #{tpu_custom_call.1} parent=75 // pred_region
          %v533 = vld [vmem:[%s514] sm:$0xff]
          %v534 = vld [vmem:[%s1] sm:$0x1]
          %v535 = vld [vmem:[%s2] sm:$0x1]
          %vm536 = vcmask 261120
          %v537 = vsel %vm536, %v533, 0.0
          %538 = vadd.xlane.f32.xlu0 %v537
          %v539 = vpop.xlane.xlu0 %538
          %v540 = vrcp.pop 32.0
          %v541 = vmul.f32 %v539, %v540
          %v542 = vsub.f32 %v533, %v541
          %v543 = vmul.f32 %v542, %v542
          %v544 = vsel %vm536, %v543, 0.0
          %545 = vadd.xlane.f32.xlu0 %v544
          %v546 = vpop.xlane.xlu0 %545
          %v547 = vmul.f32 %v546, %v540
          %v548 = vadd.f32 %v547, 1e-05
          %v549 = vrsqrt.pop %v548
          %v550 = vmul.f32 %v542, %v549
          %v552 = vlaneseq
          %v553 = vshrl.u32 %v552, 7
          %v554 = vsub.s32 0, %v553
          %v555 = vrot.slane %v534, %v554
          %v557 = vmul.f32 %v550, %v555
          %v559 = vlaneseq
          %v560 = vshrl.u32 %v559, 7
          %v561 = vsub.s32 0, %v560
          %v562 = vrot.slane %v535, %v561
          %v564 = vadd.f32 %v557, %v562
          %v565 = vpack.c.bf16 %v564, %v564
          %v566 = vld [vmem:[%s3] sm:$0xf]
          %v567 = vld [vmem:[%s3 + $0x4] sm:$0xf]
          %v568 = vld [vmem:[%s3 + $0x8] sm:$0xf]
          %v569 = vld [vmem:[%s3 + $0xc] sm:$0xf]
          %v570 = vld [vmem:[%s3 + $0x10] sm:$0xf]
          %v571 = vld [vmem:[%s3 + $0x14] sm:$0xf]
          %v572 = vld [vmem:[%s3 + $0x18] sm:$0xf]
          %v573 = vld [vmem:[%s3 + $0x1c] sm:$0xf]
          %v574 = vld [vmem:[%s3 + $0x20] sm:$0xf]
          %v575 = vld [vmem:[%s3 + $0x24] sm:$0xf]
          %v576 = vld [vmem:[%s3 + $0x28] sm:$0xf]
          %v577 = vld [vmem:[%s3 + $0x2c] sm:$0xf]
          %v578 = vld [vmem:[%s3 + $0x30] sm:$0xf]
          %v579 = vld [vmem:[%s3 + $0x34] sm:$0xf]
          %v580 = vld [vmem:[%s3 + $0x38] sm:$0xf]
          %v581 = vld [vmem:[%s3 + $0x3c] sm:$0xf]
          %v586 = vunpack.c.l.b16 %v566
          %v587 = vunpack.c.l.b16 %v567
          %v588 = vunpack.c.l.b16 %v568
          %v589 = vunpack.c.l.b16 %v569
          %v590 = vpack.c.b16 %v587, %v586
          %v591 = vpack.c.b16 %v589, %v588
          %v595 = vsel %vm536, %v565, 0
          %597 = vmatprep.subr.bf16.mxu0 0
          %598 = vmatpush1.bf16.msra.mxu0 %v590
          %599 = vmatprep.subr.bf16.mxu0 0
          %600 = vmatpush1.bf16.msra.mxu0 %v591
          %601 = vmatprep.subr.bf16.mxu0 0
          %602 = vmatpush1.bf16.msra.mxu0 0
          %603 = vmatprep.subr.bf16.mxu0 0
          %604 = vmatpush1.bf16.msra.mxu0 0
          %605 = vmatprep.subr.bf16.mxu0 0
          %606 = vmatpush1.bf16.msra.mxu0 0
          %607 = vmatprep.subr.bf16.mxu0 0
          %608 = vmatpush1.bf16.msra.mxu0 0
          %609 = vmatprep.subr.bf16.mxu0 0
          %610 = vmatpush1.bf16.msra.mxu0 0
          %611 = vmatprep.subr.bf16.mxu0 0
          %612 = vmatpush1.bf16.msra.mxu0 0
          %613 = vmatprep.subr.bf16.mxu0 0
          %614 = vmatpush1.bf16.msra.mxu0 0
          %615 = vmatprep.subr.bf16.mxu0 0
          %616 = vmatpush1.bf16.msra.mxu0 0
          %617 = vmatprep.subr.bf16.mxu0 0
          %618 = vmatpush1.bf16.msra.mxu0 0
          %619 = vmatprep.subr.bf16.mxu0 0
          %620 = vmatpush1.bf16.msra.mxu0 0
          %621 = vmatprep.subr.bf16.mxu0 0
          %622 = vmatpush1.bf16.msra.mxu0 0
          %623 = vmatprep.subr.bf16.mxu0 0
          %624 = vmatpush1.bf16.msra.mxu0 0
          %625 = vmatprep.subr.bf16.mxu0 0
          %626 = vmatpush1.bf16.msra.mxu0 0
          %627 = vmatprep.subr.bf16.mxu0 0
          %628 = vmatpush1.bf16.msra.mxu0 0
          %629 = vmatprep.mubr.bf16.mxu0 0
          %630 = vmatmul.mubr.bf16.gmra.mrb[0].mxu0 %v595
          %v631 = vpop.f32.mrb[0].mxu0
          %v632 = vadd.f32 0.0, %v631
          %v633 = vpop.f32.mrb[0].mxu0
          %v634 = vpop.f32.mrb[0].mxu0
          %v635 = vpop.f32.mrb[0].mxu0
          %636 = vdwg.mxu0
          %v641 = vunpack.c.l.b16 %v570
          %v642 = vunpack.c.l.b16 %v571
          %v643 = vunpack.c.l.b16 %v572
          %v644 = vunpack.c.l.b16 %v573
          %v645 = vpack.c.b16 %v642, %v641
          %v646 = vpack.c.b16 %v644, %v643
          %649 = vmatprep.subr.bf16.mxu0 0
          %650 = vmatpush1.bf16.msra.mxu0 %v645
          %651 = vmatprep.subr.bf16.mxu0 0
          %652 = vmatpush1.bf16.msra.mxu0 %v646
          %653 = vmatprep.subr.bf16.mxu0 0
          %654 = vmatpush1.bf16.msra.mxu0 0
          %655 = vmatprep.subr.bf16.mxu0 0
          %656 = vmatpush1.bf16.msra.mxu0 0
          %657 = vmatprep.subr.bf16.mxu0 0
          %658 = vmatpush1.bf16.msra.mxu0 0
          %659 = vmatprep.subr.bf16.mxu0 0
          %660 = vmatpush1.bf16.msra.mxu0 0
          %661 = vmatprep.subr.bf16.mxu0 0
          %662 = vmatpush1.bf16.msra.mxu0 0
          %663 = vmatprep.subr.bf16.mxu0 0
          %664 = vmatpush1.bf16.msra.mxu0 0
          %665 = vmatprep.subr.bf16.mxu0 0
          %666 = vmatpush1.bf16.msra.mxu0 0
          %667 = vmatprep.subr.bf16.mxu0 0
          %668 = vmatpush1.bf16.msra.mxu0 0
          %669 = vmatprep.subr.bf16.mxu0 0
          %670 = vmatpush1.bf16.msra.mxu0 0
          %671 = vmatprep.subr.bf16.mxu0 0
          %672 = vmatpush1.bf16.msra.mxu0 0
          %673 = vmatprep.subr.bf16.mxu0 0
          %674 = vmatpush1.bf16.msra.mxu0 0
          %675 = vmatprep.subr.bf16.mxu0 0
          %676 = vmatpush1.bf16.msra.mxu0 0
          %677 = vmatprep.subr.bf16.mxu0 0
          %678 = vmatpush1.bf16.msra.mxu0 0
          %679 = vmatprep.subr.bf16.mxu0 0
          %680 = vmatpush1.bf16.msra.mxu0 0
          %681 = vmatprep.mubr.bf16.mxu0 0
          %682 = vmatmul.mubr.bf16.gmra.mrb[0].mxu0 %v595
          %v683 = vpop.f32.mrb[0].mxu0
          %v684 = vadd.f32 0.0, %v683
          %v685 = vpop.f32.mrb[0].mxu0
          %v686 = vpop.f32.mrb[0].mxu0
          %v687 = vpop.f32.mrb[0].mxu0
          %688 = vdwg.mxu0
          %v693 = vunpack.c.l.b16 %v574
          %v694 = vunpack.c.l.b16 %v575
          %v695 = vunpack.c.l.b16 %v576
          %v696 = vunpack.c.l.b16 %v577
          %v697 = vpack.c.b16 %v694, %v693
          %v698 = vpack.c.b16 %v696, %v695
          %701 = vmatprep.subr.bf16.mxu0 0
          %702 = vmatpush1.bf16.msra.mxu0 %v697
          %703 = vmatprep.subr.bf16.mxu0 0
          %704 = vmatpush1.bf16.msra.mxu0 %v698
          %705 = vmatprep.subr.bf16.mxu0 0
          %706 = vmatpush1.bf16.msra.mxu0 0
          %707 = vmatprep.subr.bf16.mxu0 0
          %708 = vmatpush1.bf16.msra.mxu0 0
          %709 = vmatprep.subr.bf16.mxu0 0
          %710 = vmatpush1.bf16.msra.mxu0 0
          %711 = vmatprep.subr.bf16.mxu0 0
          %712 = vmatpush1.bf16.msra.mxu0 0
          %713 = vmatprep.subr.bf16.mxu0 0
          %714 = vmatpush1.bf16.msra.mxu0 0
          %715 = vmatprep.subr.bf16.mxu0 0
          %716 = vmatpush1.bf16.msra.mxu0 0
          %717 = vmatprep.subr.bf16.mxu0 0
          %718 = vmatpush1.bf16.msra.mxu0 0
          %719 = vmatprep.subr.bf16.mxu0 0
          %720 = vmatpush1.bf16.msra.mxu0 0
          %721 = vmatprep.subr.bf16.mxu0 0
          %722 = vmatpush1.bf16.msra.mxu0 0
          %723 = vmatprep.subr.bf16.mxu0 0
          %724 = vmatpush1.bf16.msra.mxu0 0
          %725 = vmatprep.subr.bf16.mxu0 0
          %726 = vmatpush1.bf16.msra.mxu0 0
          %727 = vmatprep.subr.bf16.mxu0 0
          %728 = vmatpush1.bf16.msra.mxu0 0
          %729 = vmatprep.subr.bf16.mxu0 0
          %730 = vmatpush1.bf16.msra.mxu0 0
          %731 = vmatprep.subr.bf16.mxu0 0
          %732 = vmatpush1.bf16.msra.mxu0 0
          %733 = vmatprep.mubr.bf16.mxu0 0
          %734 = vmatmul.mubr.bf16.gmra.mrb[0].mxu0 %v595
          %v735 = vpop.f32.mrb[0].mxu0
          %v736 = vadd.f32 0.0, %v735
          %v737 = vpop.f32.mrb[0].mxu0
          %v738 = vpop.f32.mrb[0].mxu0
          %v739 = vpop.f32.mrb[0].mxu0
          %740 = vdwg.mxu0
          %v745 = vunpack.c.l.b16 %v578
          %v746 = vunpack.c.l.b16 %v579
          %v747 = vunpack.c.l.b16 %v580
          %v748 = vunpack.c.l.b16 %v581
          %v749 = vpack.c.b16 %v746, %v745
          %v750 = vpack.c.b16 %v748, %v747
          %753 = vmatprep.subr.bf16.mxu0 0
          %754 = vmatpush1.bf16.msra.mxu0 %v749
          %755 = vmatprep.subr.bf16.mxu0 0
          %756 = vmatpush1.bf16.msra.mxu0 %v750
          %757 = vmatprep.subr.bf16.mxu0 0
          %758 = vmatpush1.bf16.msra.mxu0 0
          %759 = vmatprep.subr.bf16.mxu0 0
          %760 = vmatpush1.bf16.msra.mxu0 0
          %761 = vmatprep.subr.bf16.mxu0 0
          %762 = vmatpush1.bf16.msra.mxu0 0
          %763 = vmatprep.subr.bf16.mxu0 0
          %764 = vmatpush1.bf16.msra.mxu0 0
          %765 = vmatprep.subr.bf16.mxu0 0
          %766 = vmatpush1.bf16.msra.mxu0 0
          %767 = vmatprep.subr.bf16.mxu0 0
          %768 = vmatpush1.bf16.msra.mxu0 0
          %769 = vmatprep.subr.bf16.mxu0 0
          %770 = vmatpush1.bf16.msra.mxu0 0
          %771 = vmatprep.subr.bf16.mxu0 0
          %772 = vmatpush1.bf16.msra.mxu0 0
          %773 = vmatprep.subr.bf16.mxu0 0
          %774 = vmatpush1.bf16.msra.mxu0 0
          %775 = vmatprep.subr.bf16.mxu0 0
          %776 = vmatpush1.bf16.msra.mxu0 0
          %777 = vmatprep.subr.bf16.mxu0 0
          %778 = vmatpush1.bf16.msra.mxu0 0
          %779 = vmatprep.subr.bf16.mxu0 0
          %780 = vmatpush1.bf16.msra.mxu0 0
          %781 = vmatprep.subr.bf16.mxu0 0
          %782 = vmatpush1.bf16.msra.mxu0 0
          %783 = vmatprep.subr.bf16.mxu0 0
          %784 = vmatpush1.bf16.msra.mxu0 0
          %785 = vmatprep.mubr.bf16.mxu0 0
          %786 = vmatmul.mubr.bf16.gmra.mrb[0].mxu0 %v595
          %v787 = vpop.f32.mrb[0].mxu0
          %v788 = vadd.f32 0.0, %v787
          %v789 = vpop.f32.mrb[0].mxu0
          %v790 = vpop.f32.mrb[0].mxu0
          %v791 = vpop.f32.mrb[0].mxu0
          %792 = vdwg.mxu0
          %v793 = vld [vmem:[%s4] sm:$0xf]
          %v794 = vld [vmem:[%s4 + $0x4] sm:$0xf]
          %v795 = vld [vmem:[%s4 + $0x8] sm:$0xf]
          %v796 = vld [vmem:[%s4 + $0xc] sm:$0xf]
          %v797 = vld [vmem:[%s4 + $0x10] sm:$0xf]
          %v798 = vld [vmem:[%s4 + $0x14] sm:$0xf]
          %v799 = vld [vmem:[%s4 + $0x18] sm:$0xf]
          %v800 = vld [vmem:[%s4 + $0x1c] sm:$0xf]
          %v801 = vld [vmem:[%s4 + $0x20] sm:$0xf]
          %v802 = vld [vmem:[%s4 + $0x24] sm:$0xf]
          %v803 = vld [vmem:[%s4 + $0x28] sm:$0xf]
          %v804 = vld [vmem:[%s4 + $0x2c] sm:$0xf]
          %v805 = vld [vmem:[%s4 + $0x30] sm:$0xf]
          %v806 = vld [vmem:[%s4 + $0x34] sm:$0xf]
          %v807 = vld [vmem:[%s4 + $0x38] sm:$0xf]
          %v808 = vld [vmem:[%s4 + $0x3c] sm:$0xf]
          %v813 = vunpack.c.l.b16 %v793
          %v814 = vunpack.c.l.b16 %v794
          %v815 = vunpack.c.l.b16 %v795
          %v816 = vunpack.c.l.b16 %v796
          %v817 = vpack.c.b16 %v814, %v813
          %v818 = vpack.c.b16 %v816, %v815
          %821 = vmatprep.subr.bf16.mxu0 0
          %822 = vmatpush1.bf16.msra.mxu0 %v817
          %823 = vmatprep.subr.bf16.mxu0 0
          %824 = vmatpush1.bf16.msra.mxu0 %v818
          %825 = vmatprep.subr.bf16.mxu0 0
          %826 = vmatpush1.bf16.msra.mxu0 0
          %827 = vmatprep.subr.bf16.mxu0 0
          %828 = vmatpush1.bf16.msra.mxu0 0
          %829 = vmatprep.subr.bf16.mxu0 0
          %830 = vmatpush1.bf16.msra.mxu0 0
          %831 = vmatprep.subr.bf16.mxu0 0
          %832 = vmatpush1.bf16.msra.mxu0 0
          %833 = vmatprep.subr.bf16.mxu0 0
          %834 = vmatpush1.bf16.msra.mxu0 0
          %835 = vmatprep.subr.bf16.mxu0 0
          %836 = vmatpush1.bf16.msra.mxu0 0
          %837 = vmatprep.subr.bf16.mxu0 0
          %838 = vmatpush1.bf16.msra.mxu0 0
          %839 = vmatprep.subr.bf16.mxu0 0
          %840 = vmatpush1.bf16.msra.mxu0 0
          %841 = vmatprep.subr.bf16.mxu0 0
          %842 = vmatpush1.bf16.msra.mxu0 0
          %843 = vmatprep.subr.bf16.mxu0 0
          %844 = vmatpush1.bf16.msra.mxu0 0
          %845 = vmatprep.subr.bf16.mxu0 0
          %846 = vmatpush1.bf16.msra.mxu0 0
          %847 = vmatprep.subr.bf16.mxu0 0
          %848 = vmatpush1.bf16.msra.mxu0 0
          %849 = vmatprep.subr.bf16.mxu0 0
          %850 = vmatpush1.bf16.msra.mxu0 0
          %851 = vmatprep.subr.bf16.mxu0 0
          %852 = vmatpush1.bf16.msra.mxu0 0
          %853 = vmatprep.mubr.bf16.mxu0 0
          %854 = vmatmul.mubr.bf16.gmra.mrb[0].mxu0 %v595
          %v855 = vpop.f32.mrb[0].mxu0
          %v856 = vadd.f32 0.0, %v855
          %v857 = vpop.f32.mrb[0].mxu0
          %v858 = vpop.f32.mrb[0].mxu0
          %v859 = vpop.f32.mrb[0].mxu0
          %860 = vdwg.mxu0
          %v865 = vunpack.c.l.b16 %v797
          %v866 = vunpack.c.l.b16 %v798
          %v867 = vunpack.c.l.b16 %v799
          %v868 = vunpack.c.l.b16 %v800
          %v869 = vpack.c.b16 %v866, %v865
          %v870 = vpack.c.b16 %v868, %v867
          %873 = vmatprep.subr.bf16.mxu0 0
          %874 = vmatpush1.bf16.msra.mxu0 %v869
          %875 = vmatprep.subr.bf16.mxu0 0
          %876 = vmatpush1.bf16.msra.mxu0 %v870
          %877 = vmatprep.subr.bf16.mxu0 0
          %878 = vmatpush1.bf16.msra.mxu0 0
          %879 = vmatprep.subr.bf16.mxu0 0
          %880 = vmatpush1.bf16.msra.mxu0 0
          %881 = vmatprep.subr.bf16.mxu0 0
          %882 = vmatpush1.bf16.msra.mxu0 0
          %883 = vmatprep.subr.bf16.mxu0 0
          %884 = vmatpush1.bf16.msra.mxu0 0
          %885 = vmatprep.subr.bf16.mxu0 0
          %886 = vmatpush1.bf16.msra.mxu0 0
          %887 = vmatprep.subr.bf16.mxu0 0
          %888 = vmatpush1.bf16.msra.mxu0 0
          %889 = vmatprep.subr.bf16.mxu0 0
          %890 = vmatpush1.bf16.msra.mxu0 0
          %891 = vmatprep.subr.bf16.mxu0 0
          %892 = vmatpush1.bf16.msra.mxu0 0
          %893 = vmatprep.subr.bf16.mxu0 0
          %894 = vmatpush1.bf16.msra.mxu0 0
          %895 = vmatprep.subr.bf16.mxu0 0
          %896 = vmatpush1.bf16.msra.mxu0 0
          %897 = vmatprep.subr.bf16.mxu0 0
          %898 = vmatpush1.bf16.msra.mxu0 0
          %899 = vmatprep.subr.bf16.mxu0 0
          %900 = vmatpush1.bf16.msra.mxu0 0
          %901 = vmatprep.subr.bf16.mxu0 0
          %902 = vmatpush1.bf16.msra.mxu0 0
          %903 = vmatprep.subr.bf16.mxu0 0
          %904 = vmatpush1.bf16.msra.mxu0 0
          %905 = vmatprep.mubr.bf16.mxu0 0
          %906 = vmatmul.mubr.bf16.gmra.mrb[0].mxu0 %v595
          %v907 = vpop.f32.mrb[0].mxu0
          %v908 = vadd.f32 0.0, %v907
          %v909 = vpop.f32.mrb[0].mxu0
          %v910 = vpop.f32.mrb[0].mxu0
          %v911 = vpop.f32.mrb[0].mxu0
          %912 = vdwg.mxu0
          %v917 = vunpack.c.l.b16 %v801
          %v918 = vunpack.c.l.b16 %v802
          %v919 = vunpack.c.l.b16 %v803
          %v920 = vunpack.c.l.b16 %v804
          %v921 = vpack.c.b16 %v918, %v917
          %v922 = vpack.c.b16 %v920, %v919
          %925 = vmatprep.subr.bf16.mxu0 0
          %926 = vmatpush1.bf16.msra.mxu0 %v921
          %927 = vmatprep.subr.bf16.mxu0 0
          %928 = vmatpush1.bf16.msra.mxu0 %v922
          %929 = vmatprep.subr.bf16.mxu0 0
          %930 = vmatpush1.bf16.msra.mxu0 0
          %931 = vmatprep.subr.bf16.mxu0 0
          %932 = vmatpush1.bf16.msra.mxu0 0
          %933 = vmatprep.subr.bf16.mxu0 0
          %934 = vmatpush1.bf16.msra.mxu0 0
          %935 = vmatprep.subr.bf16.mxu0 0
          %936 = vmatpush1.bf16.msra.mxu0 0
          %937 = vmatprep.subr.bf16.mxu0 0
          %938 = vmatpush1.bf16.msra.mxu0 0
          %939 = vmatprep.subr.bf16.mxu0 0
          %940 = vmatpush1.bf16.msra.mxu0 0
          %941 = vmatprep.subr.bf16.mxu0 0
          %942 = vmatpush1.bf16.msra.mxu0 0
          %943 = vmatprep.subr.bf16.mxu0 0
          %944 = vmatpush1.bf16.msra.mxu0 0
          %945 = vmatprep.subr.bf16.mxu0 0
          %946 = vmatpush1.bf16.msra.mxu0 0
          %947 = vmatprep.subr.bf16.mxu0 0
          %948 = vmatpush1.bf16.msra.mxu0 0
          %949 = vmatprep.subr.bf16.mxu0 0
          %950 = vmatpush1.bf16.msra.mxu0 0
          %951 = vmatprep.subr.bf16.mxu0 0
          %952 = vmatpush1.bf16.msra.mxu0 0
          %953 = vmatprep.subr.bf16.mxu0 0
          %954 = vmatpush1.bf16.msra.mxu0 0
          %955 = vmatprep.subr.bf16.mxu0 0
          %956 = vmatpush1.bf16.msra.mxu0 0
          %957 = vmatprep.mubr.bf16.mxu0 0
          %958 = vmatmul.mubr.bf16.gmra.mrb[0].mxu0 %v595
          %v959 = vpop.f32.mrb[0].mxu0
          %v960 = vadd.f32 0.0, %v959
          %v961 = vpop.f32.mrb[0].mxu0
          %v962 = vpop.f32.mrb[0].mxu0
          %v963 = vpop.f32.mrb[0].mxu0
          %964 = vdwg.mxu0
          %v969 = vunpack.c.l.b16 %v805
          %v970 = vunpack.c.l.b16 %v806
          %v971 = vunpack.c.l.b16 %v807
          %v972 = vunpack.c.l.b16 %v808
          %v973 = vpack.c.b16 %v970, %v969
          %v974 = vpack.c.b16 %v972, %v971
          %977 = vmatprep.subr.bf16.mxu0 0
          %978 = vmatpush1.bf16.msra.mxu0 %v973
          %979 = vmatprep.subr.bf16.mxu0 0
          %980 = vmatpush1.bf16.msra.mxu0 %v974
          %981 = vmatprep.subr.bf16.mxu0 0
          %982 = vmatpush1.bf16.msra.mxu0 0
          %983 = vmatprep.subr.bf16.mxu0 0
          %984 = vmatpush1.bf16.msra.mxu0 0
          %985 = vmatprep.subr.bf16.mxu0 0
          %986 = vmatpush1.bf16.msra.mxu0 0
          %987 = vmatprep.subr.bf16.mxu0 0
          %988 = vmatpush1.bf16.msra.mxu0 0
          %989 = vmatprep.subr.bf16.mxu0 0
          %990 = vmatpush1.bf16.msra.mxu0 0
          %991 = vmatprep.subr.bf16.mxu0 0
          %992 = vmatpush1.bf16.msra.mxu0 0
          %993 = vmatprep.subr.bf16.mxu0 0
          %994 = vmatpush1.bf16.msra.mxu0 0
          %995 = vmatprep.subr.bf16.mxu0 0
          %996 = vmatpush1.bf16.msra.mxu0 0
          %997 = vmatprep.subr.bf16.mxu0 0
          %998 = vmatpush1.bf16.msra.mxu0 0
          %999 = vmatprep.subr.bf16.mxu0 0
          %1000 = vmatpush1.bf16.msra.mxu0 0
          %1001 = vmatprep.subr.bf16.mxu0 0
          %1002 = vmatpush1.bf16.msra.mxu0 0
          %1003 = vmatprep.subr.bf16.mxu0 0
          %1004 = vmatpush1.bf16.msra.mxu0 0
          %1005 = vmatprep.subr.bf16.mxu0 0
          %1006 = vmatpush1.bf16.msra.mxu0 0
          %1007 = vmatprep.subr.bf16.mxu0 0
          %1008 = vmatpush1.bf16.msra.mxu0 0
          %1009 = vmatprep.mubr.bf16.mxu0 0
          %1010 = vmatmul.mubr.bf16.gmra.mrb[0].mxu0 %v595
          %v1011 = vpop.f32.mrb[0].mxu0
          %v1012 = vadd.f32 0.0, %v1011
          %v1013 = vpop.f32.mrb[0].mxu0
          %v1014 = vpop.f32.mrb[0].mxu0
          %v1015 = vpop.f32.mrb[0].mxu0
          %1016 = vdwg.mxu0
          %v1017 = vld [vmem:[%s5] sm:$0xf]
          %v1018 = vld [vmem:[%s5 + $0x4] sm:$0xf]
          %v1019 = vld [vmem:[%s5 + $0x8] sm:$0xf]
          %v1020 = vld [vmem:[%s5 + $0xc] sm:$0xf]
          %v1021 = vld [vmem:[%s5 + $0x10] sm:$0xf]
          %v1022 = vld [vmem:[%s5 + $0x14] sm:$0xf]
          %v1023 = vld [vmem:[%s5 + $0x18] sm:$0xf]
          %v1024 = vld [vmem:[%s5 + $0x1c] sm:$0xf]
          %v1025 = vld [vmem:[%s5 + $0x20] sm:$0xf]
          %v1026 = vld [vmem:[%s5 + $0x24] sm:$0xf]
          %v1027 = vld [vmem:[%s5 + $0x28] sm:$0xf]
          %v1028 = vld [vmem:[%s5 + $0x2c] sm:$0xf]
          %v1029 = vld [vmem:[%s5 + $0x30] sm:$0xf]
          %v1030 = vld [vmem:[%s5 + $0x34] sm:$0xf]
          %v1031 = vld [vmem:[%s5 + $0x38] sm:$0xf]
          %v1032 = vld [vmem:[%s5 + $0x3c] sm:$0xf]
          %v1037 = vunpack.c.l.b16 %v1017
          %v1038 = vunpack.c.l.b16 %v1018
          %v1039 = vunpack.c.l.b16 %v1019
          %v1040 = vunpack.c.l.b16 %v1020
          %v1041 = vpack.c.b16 %v1038, %v1037
          %v1042 = vpack.c.b16 %v1040, %v1039
          %1045 = vmatprep.subr.bf16.mxu0 0
          %1046 = vmatpush1.bf16.msra.mxu0 %v1041
          %1047 = vmatprep.subr.bf16.mxu0 0
          %1048 = vmatpush1.bf16.msra.mxu0 %v1042
          %1049 = vmatprep.subr.bf16.mxu0 0
          %1050 = vmatpush1.bf16.msra.mxu0 0
          %1051 = vmatprep.subr.bf16.mxu0 0
          %1052 = vmatpush1.bf16.msra.mxu0 0
          %1053 = vmatprep.subr.bf16.mxu0 0
          %1054 = vmatpush1.bf16.msra.mxu0 0
          %1055 = vmatprep.subr.bf16.mxu0 0
          %1056 = vmatpush1.bf16.msra.mxu0 0
          %1057 = vmatprep.subr.bf16.mxu0 0
          %1058 = vmatpush1.bf16.msra.mxu0 0
          %1059 = vmatprep.subr.bf16.mxu0 0
          %1060 = vmatpush1.bf16.msra.mxu0 0
          %1061 = vmatprep.subr.bf16.mxu0 0
          %1062 = vmatpush1.bf16.msra.mxu0 0
          %1063 = vmatprep.subr.bf16.mxu0 0
          %1064 = vmatpush1.bf16.msra.mxu0 0
          %1065 = vmatprep.subr.bf16.mxu0 0
          %1066 = vmatpush1.bf16.msra.mxu0 0
          %1067 = vmatprep.subr.bf16.mxu0 0
          %1068 = vmatpush1.bf16.msra.mxu0 0
          %1069 = vmatprep.subr.bf16.mxu0 0
          %1070 = vmatpush1.bf16.msra.mxu0 0
          %1071 = vmatprep.subr.bf16.mxu0 0
          %1072 = vmatpush1.bf16.msra.mxu0 0
          %1073 = vmatprep.subr.bf16.mxu0 0
          %1074 = vmatpush1.bf16.msra.mxu0 0
          %1075 = vmatprep.subr.bf16.mxu0 0
          %1076 = vmatpush1.bf16.msra.mxu0 0
          %1077 = vmatprep.mubr.bf16.mxu0 0
          %1078 = vmatmul.mubr.bf16.gmra.mrb[0].mxu0 %v595
          %v1079 = vpop.f32.mrb[0].mxu0
          %v1080 = vadd.f32 0.0, %v1079
          %v1081 = vpop.f32.mrb[0].mxu0
          %v1082 = vpop.f32.mrb[0].mxu0
          %v1083 = vpop.f32.mrb[0].mxu0
          %1084 = vdwg.mxu0
          %v1089 = vunpack.c.l.b16 %v1021
          %v1090 = vunpack.c.l.b16 %v1022
          %v1091 = vunpack.c.l.b16 %v1023
          %v1092 = vunpack.c.l.b16 %v1024
          %v1093 = vpack.c.b16 %v1090, %v1089
          %v1094 = vpack.c.b16 %v1092, %v1091
          %1097 = vmatprep.subr.bf16.mxu0 0
          %1098 = vmatpush1.bf16.msra.mxu0 %v1093
          %1099 = vmatprep.subr.bf16.mxu0 0
          %1100 = vmatpush1.bf16.msra.mxu0 %v1094
          %1101 = vmatprep.subr.bf16.mxu0 0
          %1102 = vmatpush1.bf16.msra.mxu0 0
          %1103 = vmatprep.subr.bf16.mxu0 0
          %1104 = vmatpush1.bf16.msra.mxu0 0
          %1105 = vmatprep.subr.bf16.mxu0 0
          %1106 = vmatpush1.bf16.msra.mxu0 0
          %1107 = vmatprep.subr.bf16.mxu0 0
          %1108 = vmatpush1.bf16.msra.mxu0 0
          %1109 = vmatprep.subr.bf16.mxu0 0
          %1110 = vmatpush1.bf16.msra.mxu0 0
          %1111 = vmatprep.subr.bf16.mxu0 0
          %1112 = vmatpush1.bf16.msra.mxu0 0
          %1113 = vmatprep.subr.bf16.mxu0 0
          %1114 = vmatpush1.bf16.msra.mxu0 0
          %1115 = vmatprep.subr.bf16.mxu0 0
          %1116 = vmatpush1.bf16.msra.mxu0 0
          %1117 = vmatprep.subr.bf16.mxu0 0
          %1118 = vmatpush1.bf16.msra.mxu0 0
          %1119 = vmatprep.subr.bf16.mxu0 0
          %1120 = vmatpush1.bf16.msra.mxu0 0
          %1121 = vmatprep.subr.bf16.mxu0 0
          %1122 = vmatpush1.bf16.msra.mxu0 0
          %1123 = vmatprep.subr.bf16.mxu0 0
          %1124 = vmatpush1.bf16.msra.mxu0 0
          %1125 = vmatprep.subr.bf16.mxu0 0
          %1126 = vmatpush1.bf16.msra.mxu0 0
          %1127 = vmatprep.subr.bf16.mxu0 0
          %1128 = vmatpush1.bf16.msra.mxu0 0
          %1129 = vmatprep.mubr.bf16.mxu0 0
          %1130 = vmatmul.mubr.bf16.gmra.mrb[0].mxu0 %v595
          %v1131 = vpop.f32.mrb[0].mxu0
          %v1132 = vadd.f32 0.0, %v1131
          %v1133 = vpop.f32.mrb[0].mxu0
          %v1134 = vpop.f32.mrb[0].mxu0
          %v1135 = vpop.f32.mrb[0].mxu0
          %1136 = vdwg.mxu0
          %v1141 = vunpack.c.l.b16 %v1025
          %v1142 = vunpack.c.l.b16 %v1026
          %v1143 = vunpack.c.l.b16 %v1027
          %v1144 = vunpack.c.l.b16 %v1028
          %v1145 = vpack.c.b16 %v1142, %v1141
          %v1146 = vpack.c.b16 %v1144, %v1143
          %1149 = vmatprep.subr.bf16.mxu0 0
          %1150 = vmatpush1.bf16.msra.mxu0 %v1145
          %1151 = vmatprep.subr.bf16.mxu0 0
          %1152 = vmatpush1.bf16.msra.mxu0 %v1146
          %1153 = vmatprep.subr.bf16.mxu0 0
          %1154 = vmatpush1.bf16.msra.mxu0 0
          %1155 = vmatprep.subr.bf16.mxu0 0
          %1156 = vmatpush1.bf16.msra.mxu0 0
          %1157 = vmatprep.subr.bf16.mxu0 0
          %1158 = vmatpush1.bf16.msra.mxu0 0
          %1159 = vmatprep.subr.bf16.mxu0 0
          %1160 = vmatpush1.bf16.msra.mxu0 0
          %1161 = vmatprep.subr.bf16.mxu0 0
          %1162 = vmatpush1.bf16.msra.mxu0 0
          %1163 = vmatprep.subr.bf16.mxu0 0
          %1164 = vmatpush1.bf16.msra.mxu0 0
          %1165 = vmatprep.subr.bf16.mxu0 0
          %1166 = vmatpush1.bf16.msra.mxu0 0
          %1167 = vmatprep.subr.bf16.mxu0 0
          %1168 = vmatpush1.bf16.msra.mxu0 0
          %1169 = vmatprep.subr.bf16.mxu0 0
          %1170 = vmatpush1.bf16.msra.mxu0 0
          %1171 = vmatprep.subr.bf16.mxu0 0
          %1172 = vmatpush1.bf16.msra.mxu0 0
          %1173 = vmatprep.subr.bf16.mxu0 0
          %1174 = vmatpush1.bf16.msra.mxu0 0
          %1175 = vmatprep.subr.bf16.mxu0 0
          %1176 = vmatpush1.bf16.msra.mxu0 0
          %1177 = vmatprep.subr.bf16.mxu0 0
          %1178 = vmatpush1.bf16.msra.mxu0 0
          %1179 = vmatprep.subr.bf16.mxu0 0
          %1180 = vmatpush1.bf16.msra.mxu0 0
          %1181 = vmatprep.mubr.bf16.mxu0 0
          %1182 = vmatmul.mubr.bf16.gmra.mrb[0].mxu0 %v595
          %v1183 = vpop.f32.mrb[0].mxu0
          %v1184 = vadd.f32 0.0, %v1183
          %v1185 = vpop.f32.mrb[0].mxu0
          %v1186 = vpop.f32.mrb[0].mxu0
          %v1187 = vpop.f32.mrb[0].mxu0
          %1188 = vdwg.mxu0
          %v1193 = vunpack.c.l.b16 %v1029
          %v1194 = vunpack.c.l.b16 %v1030
          %v1195 = vunpack.c.l.b16 %v1031
          %v1196 = vunpack.c.l.b16 %v1032
          %v1197 = vpack.c.b16 %v1194, %v1193
          %v1198 = vpack.c.b16 %v1196, %v1195
          %1201 = vmatprep.subr.bf16.mxu0 0
          %1202 = vmatpush1.bf16.msra.mxu0 %v1197
          %1203 = vmatprep.subr.bf16.mxu0 0
          %1204 = vmatpush1.bf16.msra.mxu0 %v1198
          %1205 = vmatprep.subr.bf16.mxu0 0
          %1206 = vmatpush1.bf16.msra.mxu0 0
          %1207 = vmatprep.subr.bf16.mxu0 0
          %1208 = vmatpush1.bf16.msra.mxu0 0
          %1209 = vmatprep.subr.bf16.mxu0 0
          %1210 = vmatpush1.bf16.msra.mxu0 0
          %1211 = vmatprep.subr.bf16.mxu0 0
          %1212 = vmatpush1.bf16.msra.mxu0 0
          %1213 = vmatprep.subr.bf16.mxu0 0
          %1214 = vmatpush1.bf16.msra.mxu0 0
          %1215 = vmatprep.subr.bf16.mxu0 0
          %1216 = vmatpush1.bf16.msra.mxu0 0
          %1217 = vmatprep.subr.bf16.mxu0 0
          %1218 = vmatpush1.bf16.msra.mxu0 0
          %1219 = vmatprep.subr.bf16.mxu0 0
          %1220 = vmatpush1.bf16.msra.mxu0 0
          %1221 = vmatprep.subr.bf16.mxu0 0
          %1222 = vmatpush1.bf16.msra.mxu0 0
          %1223 = vmatprep.subr.bf16.mxu0 0
          %1224 = vmatpush1.bf16.msra.mxu0 0
          %1225 = vmatprep.subr.bf16.mxu0 0
          %1226 = vmatpush1.bf16.msra.mxu0 0
          %1227 = vmatprep.subr.bf16.mxu0 0
          %1228 = vmatpush1.bf16.msra.mxu0 0
          %1229 = vmatprep.subr.bf16.mxu0 0
          %1230 = vmatpush1.bf16.msra.mxu0 0
          %1231 = vmatprep.subr.bf16.mxu0 0
          %1232 = vmatpush1.bf16.msra.mxu0 0
          %1233 = vmatprep.mubr.bf16.mxu0 0
          %1234 = vmatmul.mubr.bf16.gmra.mrb[0].mxu0 %v595
          %v1235 = vpop.f32.mrb[0].mxu0
          %v1236 = vadd.f32 0.0, %v1235
          %v1237 = vpop.f32.mrb[0].mxu0
          %v1238 = vpop.f32.mrb[0].mxu0
          %v1239 = vpop.f32.mrb[0].mxu0
          %1240 = vdwg.mxu0
          %v1241 = vpack.c.bf16 %v632, %v632
          %v1242 = vpack.c.bf16 %v684, %v684
          %v1243 = vpack.c.bf16 %v736, %v736
          %v1244 = vpack.c.bf16 %v788, %v788
          %v1245 = vpack.c.bf16 %v856, %v856
          %v1246 = vpack.c.bf16 %v908, %v908
          %v1247 = vpack.c.bf16 %v960, %v960
          %v1248 = vpack.c.bf16 %v1012, %v1012
          %vm1249 = vcmask 64512
          %v1251 = vsel %vm1249, %v1241, 0
          %v1254 = vsel %vm1249, %v1245, 0
          %1256 = vmatprep.subr.bf16.mxu0 0
          %1257 = vmatpush1.bf16.xpose.msra.mxu0 %v1254
          %1258 = vmatprep.subr.bf16.mxu0 0
          %1259 = vmatpush1.bf16.xpose.msra.mxu0 0
          %1260 = vmatprep.subr.bf16.mxu0 0
          %1261 = vmatpush1.bf16.xpose.msra.mxu0 0
          %1262 = vmatprep.subr.bf16.mxu0 0
          %1263 = vmatpush1.bf16.xpose.msra.mxu0 0
          %1264 = vmatprep.subr.bf16.mxu0 0
          %1265 = vmatpush1.bf16.xpose.msra.mxu0 0
          %1266 = vmatprep.subr.bf16.mxu0 0
          %1267 = vmatpush1.bf16.xpose.msra.mxu0 0
          %1268 = vmatprep.subr.bf16.mxu0 0
          %1269 = vmatpush1.bf16.xpose.msra.mxu0 0
          %1270 = vmatprep.subr.bf16.mxu0 0
          %1271 = vmatpush1.bf16.xpose.msra.mxu0 0
          %1272 = vmatprep.subr.bf16.mxu0 0
          %1273 = vmatpush1.bf16.xpose.msra.mxu0 0
          %1274 = vmatprep.subr.bf16.mxu0 0
          %1275 = vmatpush1.bf16.xpose.msra.mxu0 0
          %1276 = vmatprep.subr.bf16.mxu0 0
          %1277 = vmatpush1.bf16.xpose.msra.mxu0 0
          %1278 = vmatprep.subr.bf16.mxu0 0
          %1279 = vmatpush1.bf16.xpose.msra.mxu0 0
          %1280 = vmatprep.subr.bf16.mxu0 0
          %1281 = vmatpush1.bf16.xpose.msra.mxu0 0
          %1282 = vmatprep.subr.bf16.mxu0 0
          %1283 = vmatpush1.bf16.xpose.msra.mxu0 0
          %1284 = vmatprep.subr.bf16.mxu0 0
          %1285 = vmatpush1.bf16.xpose.msra.mxu0 0
          %1286 = vmatprep.subr.bf16.mxu0 0
          %1287 = vmatpush1.bf16.xpose.msra.mxu0 0
          %1288 = vmatprep.mubr.bf16.mxu0 0
          %1289 = vmatmul.mubr.bf16.gmra.mrb[0].mxu0 %v1251
          %v1290 = vpop.f32.mrb[0].mxu0
          %v1291 = vadd.f32 0.0, %v1290
          %v1292 = vpop.f32.mrb[0].mxu0
          %v1293 = vpop.f32.mrb[0].mxu0
          %v1294 = vpop.f32.mrb[0].mxu0
          %1295 = vdwg.mxu0
          %v1297 = vsel %vm1249, %v1242, 0
          %v1300 = vsel %vm1249, %v1246, 0
          %1302 = vmatprep.subr.bf16.mxu0 0
          %1303 = vmatpush1.bf16.xpose.msra.mxu0 %v1300
          %1304 = vmatprep.subr.bf16.mxu0 0
          %1305 = vmatpush1.bf16.xpose.msra.mxu0 0
          %1306 = vmatprep.subr.bf16.mxu0 0
          %1307 = vmatpush1.bf16.xpose.msra.mxu0 0
          %1308 = vmatprep.subr.bf16.mxu0 0
          %1309 = vmatpush1.bf16.xpose.msra.mxu0 0
          %1310 = vmatprep.subr.bf16.mxu0 0
          %1311 = vmatpush1.bf16.xpose.msra.mxu0 0
          %1312 = vmatprep.subr.bf16.mxu0 0
          %1313 = vmatpush1.bf16.xpose.msra.mxu0 0
          %1314 = vmatprep.subr.bf16.mxu0 0
          %1315 = vmatpush1.bf16.xpose.msra.mxu0 0
          %1316 = vmatprep.subr.bf16.mxu0 0
          %1317 = vmatpush1.bf16.xpose.msra.mxu0 0
          %1318 = vmatprep.subr.bf16.mxu0 0
          %1319 = vmatpush1.bf16.xpose.msra.mxu0 0
          %1320 = vmatprep.subr.bf16.mxu0 0
          %1321 = vmatpush1.bf16.xpose.msra.mxu0 0
          %1322 = vmatprep.subr.bf16.mxu0 0
          %1323 = vmatpush1.bf16.xpose.msra.mxu0 0
          %1324 = vmatprep.subr.bf16.mxu0 0
          %1325 = vmatpush1.bf16.xpose.msra.mxu0 0
          %1326 = vmatprep.subr.bf16.mxu0 0
          %1327 = vmatpush1.bf16.xpose.msra.mxu0 0
          %1328 = vmatprep.subr.bf16.mxu0 0
          %1329 = vmatpush1.bf16.xpose.msra.mxu0 0
          %1330 = vmatprep.subr.bf16.mxu0 0
          %1331 = vmatpush1.bf16.xpose.msra.mxu0 0
          %1332 = vmatprep.subr.bf16.mxu0 0
          %1333 = vmatpush1.bf16.xpose.msra.mxu0 0
          %1334 = vmatprep.mubr.bf16.mxu0 0
          %1335 = vmatmul.mubr.bf16.gmra.mrb[0].mxu0 %v1297
          %v1336 = vpop.f32.mrb[0].mxu0
          %v1337 = vadd.f32 0.0, %v1336
          %v1338 = vpop.f32.mrb[0].mxu0
          %v1339 = vpop.f32.mrb[0].mxu0
          %v1340 = vpop.f32.mrb[0].mxu0
          %1341 = vdwg.mxu0
          %v1343 = vsel %vm1249, %v1243, 0
          %v1346 = vsel %vm1249, %v1247, 0
          %1348 = vmatprep.subr.bf16.mxu0 0
          %1349 = vmatpush1.bf16.xpose.msra.mxu0 %v1346
          %1350 = vmatprep.subr.bf16.mxu0 0
          %1351 = vmatpush1.bf16.xpose.msra.mxu0 0
          %1352 = vmatprep.subr.bf16.mxu0 0
          %1353 = vmatpush1.bf16.xpose.msra.mxu0 0
          %1354 = vmatprep.subr.bf16.mxu0 0
          %1355 = vmatpush1.bf16.xpose.msra.mxu0 0
          %1356 = vmatprep.subr.bf16.mxu0 0
          %1357 = vmatpush1.bf16.xpose.msra.mxu0 0
          %1358 = vmatprep.subr.bf16.mxu0 0
          %1359 = vmatpush1.bf16.xpose.msra.mxu0 0
          %1360 = vmatprep.subr.bf16.mxu0 0
          %1361 = vmatpush1.bf16.xpose.msra.mxu0 0
          %1362 = vmatprep.subr.bf16.mxu0 0
          %1363 = vmatpush1.bf16.xpose.msra.mxu0 0
          %1364 = vmatprep.subr.bf16.mxu0 0
          %1365 = vmatpush1.bf16.xpose.msra.mxu0 0
          %1366 = vmatprep.subr.bf16.mxu0 0
          %1367 = vmatpush1.bf16.xpose.msra.mxu0 0
          %1368 = vmatprep.subr.bf16.mxu0 0
          %1369 = vmatpush1.bf16.xpose.msra.mxu0 0
          %1370 = vmatprep.subr.bf16.mxu0 0
          %1371 = vmatpush1.bf16.xpose.msra.mxu0 0
          %1372 = vmatprep.subr.bf16.mxu0 0
          %1373 = vmatpush1.bf16.xpose.msra.mxu0 0
          %1374 = vmatprep.subr.bf16.mxu0 0
          %1375 = vmatpush1.bf16.xpose.msra.mxu0 0
          %1376 = vmatprep.subr.bf16.mxu0 0
          %1377 = vmatpush1.bf16.xpose.msra.mxu0 0
          %1378 = vmatprep.subr.bf16.mxu0 0
          %1379 = vmatpush1.bf16.xpose.msra.mxu0 0
          %1380 = vmatprep.mubr.bf16.mxu0 0
          %1381 = vmatmul.mubr.bf16.gmra.mrb[0].mxu0 %v1343
          %v1382 = vpop.f32.mrb[0].mxu0
          %v1383 = vadd.f32 0.0, %v1382
          %v1384 = vpop.f32.mrb[0].mxu0
          %v1385 = vpop.f32.mrb[0].mxu0
          %v1386 = vpop.f32.mrb[0].mxu0
          %1387 = vdwg.mxu0
          %v1389 = vsel %vm1249, %v1244, 0
          %v1392 = vsel %vm1249, %v1248, 0
          %1394 = vmatprep.subr.bf16.mxu0 0
          %1395 = vmatpush1.bf16.xpose.msra.mxu0 %v1392
          %1396 = vmatprep.subr.bf16.mxu0 0
          %1397 = vmatpush1.bf16.xpose.msra.mxu0 0
          %1398 = vmatprep.subr.bf16.mxu0 0
          %1399 = vmatpush1.bf16.xpose.msra.mxu0 0
          %1400 = vmatprep.subr.bf16.mxu0 0
          %1401 = vmatpush1.bf16.xpose.msra.mxu0 0
          %1402 = vmatprep.subr.bf16.mxu0 0
          %1403 = vmatpush1.bf16.xpose.msra.mxu0 0
          %1404 = vmatprep.subr.bf16.mxu0 0
          %1405 = vmatpush1.bf16.xpose.msra.mxu0 0
          %1406 = vmatprep.subr.bf16.mxu0 0
          %1407 = vmatpush1.bf16.xpose.msra.mxu0 0
          %1408 = vmatprep.subr.bf16.mxu0 0
          %1409 = vmatpush1.bf16.xpose.msra.mxu0 0
          %1410 = vmatprep.subr.bf16.mxu0 0
          %1411 = vmatpush1.bf16.xpose.msra.mxu0 0
          %1412 = vmatprep.subr.bf16.mxu0 0
          %1413 = vmatpush1.bf16.xpose.msra.mxu0 0
          %1414 = vmatprep.subr.bf16.mxu0 0
          %1415 = vmatpush1.bf16.xpose.msra.mxu0 0
          %1416 = vmatprep.subr.bf16.mxu0 0
          %1417 = vmatpush1.bf16.xpose.msra.mxu0 0
          %1418 = vmatprep.subr.bf16.mxu0 0
          %1419 = vmatpush1.bf16.xpose.msra.mxu0 0
          %1420 = vmatprep.subr.bf16.mxu0 0
          %1421 = vmatpush1.bf16.xpose.msra.mxu0 0
          %1422 = vmatprep.subr.bf16.mxu0 0
          %1423 = vmatpush1.bf16.xpose.msra.mxu0 0
          %1424 = vmatprep.subr.bf16.mxu0 0
          %1425 = vmatpush1.bf16.xpose.msra.mxu0 0
          %1426 = vmatprep.mubr.bf16.mxu0 0
          %1427 = vmatmul.mubr.bf16.gmra.mrb[0].mxu0 %v1389
          %v1428 = vpop.f32.mrb[0].mxu0
          %v1429 = vadd.f32 0.0, %v1428
          %v1430 = vpop.f32.mrb[0].mxu0
          %v1431 = vpop.f32.mrb[0].mxu0
          %v1432 = vpop.f32.mrb[0].mxu0
          %1433 = vdwg.mxu0
          %v1434 = vsel %vm1249, %v1291, -inf
          %1435 = vmax.xlane.f32.xlu0 %v1434
          %v1436 = vpop.xlane.xlu0 %1435
          %v1437 = vsel %vm1249, %v1337, -inf
          %1438 = vmax.xlane.f32.xlu0 %v1437
          %v1439 = vpop.xlane.xlu0 %1438
          %v1440 = vsel %vm1249, %v1383, -inf
          %1441 = vmax.xlane.f32.xlu0 %v1440
          %v1442 = vpop.xlane.xlu0 %1441
          %v1443 = vsel %vm1249, %v1429, -inf
          %1444 = vmax.xlane.f32.xlu0 %v1443
          %v1445 = vpop.xlane.xlu0 %1444
          %v1446 = vsub.f32 %v1291, %v1436
          %v1447 = vsub.f32 %v1337, %v1439
          %v1448 = vsub.f32 %v1383, %v1442
          %v1449 = vsub.f32 %v1429, %v1445
          %v1450 = vmul.f32 %v1446, 1.442695
          %v1451 = vpow.pop %v1450
          %v1452 = vmul.f32 %v1447, 1.442695
          %v1453 = vpow.pop %v1452
          %v1454 = vmul.f32 %v1448, 1.442695
          %v1455 = vpow.pop %v1454
          %v1456 = vmul.f32 %v1449, 1.442695
          %v1457 = vpow.pop %v1456
          %v1458 = vsel %vm1249, %v1451, 0.0
          %1459 = vadd.xlane.f32.xlu0 %v1458
          %v1460 = vpop.xlane.xlu0 %1459
          %v1461 = vsel %vm1249, %v1453, 0.0
          %1462 = vadd.xlane.f32.xlu0 %v1461
          %v1463 = vpop.xlane.xlu0 %1462
          %v1464 = vsel %vm1249, %v1455, 0.0
          %1465 = vadd.xlane.f32.xlu0 %v1464
          %v1466 = vpop.xlane.xlu0 %1465
          %v1467 = vsel %vm1249, %v1457, 0.0
          %1468 = vadd.xlane.f32.xlu0 %v1467
          %v1469 = vpop.xlane.xlu0 %1468
          %v1470 = vpack.c.bf16 %v1451, %v1451
          %v1471 = vpack.c.bf16 %v1453, %v1453
          %v1472 = vpack.c.bf16 %v1455, %v1455
          %v1473 = vpack.c.bf16 %v1457, %v1457
          %v1474 = vpack.c.bf16 %v1080, %v1080
          %v1475 = vpack.c.bf16 %v1132, %v1132
          %v1476 = vpack.c.bf16 %v1184, %v1184
          %v1477 = vpack.c.bf16 %v1236, %v1236
          %v1479 = vsel %vm1249, %v1470, 0
          %vm1481 = vcmask 1043456
          %v1483 = vsel %vm1481, %v1474, 0
          %1485 = vmatprep.subr.bf16.mxu0 0
          %1486 = vmatpush1.bf16.msra.mxu0 %v1483
          %1487 = vmatprep.subr.bf16.mxu0 0
          %1488 = vmatpush1.bf16.msra.mxu0 0
          %1489 = vmatprep.subr.bf16.mxu0 0
          %1490 = vmatpush1.bf16.msra.mxu0 0
          %1491 = vmatprep.subr.bf16.mxu0 0
          %1492 = vmatpush1.bf16.msra.mxu0 0
          %1493 = vmatprep.subr.bf16.mxu0 0
          %1494 = vmatpush1.bf16.msra.mxu0 0
          %1495 = vmatprep.subr.bf16.mxu0 0
          %1496 = vmatpush1.bf16.msra.mxu0 0
          %1497 = vmatprep.subr.bf16.mxu0 0
          %1498 = vmatpush1.bf16.msra.mxu0 0
          %1499 = vmatprep.subr.bf16.mxu0 0
          %1500 = vmatpush1.bf16.msra.mxu0 0
          %1501 = vmatprep.subr.bf16.mxu0 0
          %1502 = vmatpush1.bf16.msra.mxu0 0
          %1503 = vmatprep.subr.bf16.mxu0 0
          %1504 = vmatpush1.bf16.msra.mxu0 0
          %1505 = vmatprep.subr.bf16.mxu0 0
          %1506 = vmatpush1.bf16.msra.mxu0 0
          %1507 = vmatprep.subr.bf16.mxu0 0
          %1508 = vmatpush1.bf16.msra.mxu0 0
          %1509 = vmatprep.subr.bf16.mxu0 0
          %1510 = vmatpush1.bf16.msra.mxu0 0
          %1511 = vmatprep.subr.bf16.mxu0 0
          %1512 = vmatpush1.bf16.msra.mxu0 0
          %1513 = vmatprep.subr.bf16.mxu0 0
          %1514 = vmatpush1.bf16.msra.mxu0 0
          %1515 = vmatprep.subr.bf16.mxu0 0
          %1516 = vmatpush1.bf16.msra.mxu0 0
          %1517 = vmatprep.mubr.bf16.mxu0 0
          %1518 = vmatmul.mubr.bf16.gmra.mrb[0].mxu0 %v1479
          %v1519 = vpop.f32.mrb[0].mxu0
          %v1520 = vadd.f32 0.0, %v1519
          %v1521 = vpop.f32.mrb[0].mxu0
          %v1522 = vpop.f32.mrb[0].mxu0
          %v1523 = vpop.f32.mrb[0].mxu0
          %1524 = vdwg.mxu0
          %v1526 = vsel %vm1249, %v1471, 0
          %v1529 = vsel %vm1481, %v1475, 0
          %1531 = vmatprep.subr.bf16.mxu0 0
          %1532 = vmatpush1.bf16.msra.mxu0 %v1529
          %1533 = vmatprep.subr.bf16.mxu0 0
          %1534 = vmatpush1.bf16.msra.mxu0 0
          %1535 = vmatprep.subr.bf16.mxu0 0
          %1536 = vmatpush1.bf16.msra.mxu0 0
          %1537 = vmatprep.subr.bf16.mxu0 0
          %1538 = vmatpush1.bf16.msra.mxu0 0
          %1539 = vmatprep.subr.bf16.mxu0 0
          %1540 = vmatpush1.bf16.msra.mxu0 0
          %1541 = vmatprep.subr.bf16.mxu0 0
          %1542 = vmatpush1.bf16.msra.mxu0 0
          %1543 = vmatprep.subr.bf16.mxu0 0
          %1544 = vmatpush1.bf16.msra.mxu0 0
          %1545 = vmatprep.subr.bf16.mxu0 0
          %1546 = vmatpush1.bf16.msra.mxu0 0
          %1547 = vmatprep.subr.bf16.mxu0 0
          %1548 = vmatpush1.bf16.msra.mxu0 0
          %1549 = vmatprep.subr.bf16.mxu0 0
          %1550 = vmatpush1.bf16.msra.mxu0 0
          %1551 = vmatprep.subr.bf16.mxu0 0
          %1552 = vmatpush1.bf16.msra.mxu0 0
          %1553 = vmatprep.subr.bf16.mxu0 0
          %1554 = vmatpush1.bf16.msra.mxu0 0
          %1555 = vmatprep.subr.bf16.mxu0 0
          %1556 = vmatpush1.bf16.msra.mxu0 0
          %1557 = vmatprep.subr.bf16.mxu0 0
          %1558 = vmatpush1.bf16.msra.mxu0 0
          %1559 = vmatprep.subr.bf16.mxu0 0
          %1560 = vmatpush1.bf16.msra.mxu0 0
          %1561 = vmatprep.subr.bf16.mxu0 0
          %1562 = vmatpush1.bf16.msra.mxu0 0
          %1563 = vmatprep.mubr.bf16.mxu0 0
          %1564 = vmatmul.mubr.bf16.gmra.mrb[0].mxu0 %v1526
          %v1565 = vpop.f32.mrb[0].mxu0
          %v1566 = vadd.f32 0.0, %v1565
          %v1567 = vpop.f32.mrb[0].mxu0
          %v1568 = vpop.f32.mrb[0].mxu0
          %v1569 = vpop.f32.mrb[0].mxu0
          %1570 = vdwg.mxu0
          %v1572 = vsel %vm1249, %v1472, 0
          %v1575 = vsel %vm1481, %v1476, 0
          %1577 = vmatprep.subr.bf16.mxu0 0
          %1578 = vmatpush1.bf16.msra.mxu0 %v1575
          %1579 = vmatprep.subr.bf16.mxu0 0
          %1580 = vmatpush1.bf16.msra.mxu0 0
          %1581 = vmatprep.subr.bf16.mxu0 0
          %1582 = vmatpush1.bf16.msra.mxu0 0
          %1583 = vmatprep.subr.bf16.mxu0 0
          %1584 = vmatpush1.bf16.msra.mxu0 0
          %1585 = vmatprep.subr.bf16.mxu0 0
          %1586 = vmatpush1.bf16.msra.mxu0 0
          %1587 = vmatprep.subr.bf16.mxu0 0
          %1588 = vmatpush1.bf16.msra.mxu0 0
          %1589 = vmatprep.subr.bf16.mxu0 0
          %1590 = vmatpush1.bf16.msra.mxu0 0
          %1591 = vmatprep.subr.bf16.mxu0 0
          %1592 = vmatpush1.bf16.msra.mxu0 0
          %1593 = vmatprep.subr.bf16.mxu0 0
          %1594 = vmatpush1.bf16.msra.mxu0 0
          %1595 = vmatprep.subr.bf16.mxu0 0
          %1596 = vmatpush1.bf16.msra.mxu0 0
          %1597 = vmatprep.subr.bf16.mxu0 0
          %1598 = vmatpush1.bf16.msra.mxu0 0
          %1599 = vmatprep.subr.bf16.mxu0 0
          %1600 = vmatpush1.bf16.msra.mxu0 0
          %1601 = vmatprep.subr.bf16.mxu0 0
          %1602 = vmatpush1.bf16.msra.mxu0 0
          %1603 = vmatprep.subr.bf16.mxu0 0
          %1604 = vmatpush1.bf16.msra.mxu0 0
          %1605 = vmatprep.subr.bf16.mxu0 0
          %1606 = vmatpush1.bf16.msra.mxu0 0
          %1607 = vmatprep.subr.bf16.mxu0 0
          %1608 = vmatpush1.bf16.msra.mxu0 0
          %1609 = vmatprep.mubr.bf16.mxu0 0
          %1610 = vmatmul.mubr.bf16.gmra.mrb[0].mxu0 %v1572
          %v1611 = vpop.f32.mrb[0].mxu0
          %v1612 = vadd.f32 0.0, %v1611
          %v1613 = vpop.f32.mrb[0].mxu0
          %v1614 = vpop.f32.mrb[0].mxu0
          %v1615 = vpop.f32.mrb[0].mxu0
          %1616 = vdwg.mxu0
          %v1618 = vsel %vm1249, %v1473, 0
          %v1621 = vsel %vm1481, %v1477, 0
          %1623 = vmatprep.subr.bf16.mxu0 0
          %1624 = vmatpush1.bf16.msra.mxu0 %v1621
          %1625 = vmatprep.subr.bf16.mxu0 0
          %1626 = vmatpush1.bf16.msra.mxu0 0
          %1627 = vmatprep.subr.bf16.mxu0 0
          %1628 = vmatpush1.bf16.msra.mxu0 0
          %1629 = vmatprep.subr.bf16.mxu0 0
          %1630 = vmatpush1.bf16.msra.mxu0 0
          %1631 = vmatprep.subr.bf16.mxu0 0
          %1632 = vmatpush1.bf16.msra.mxu0 0
          %1633 = vmatprep.subr.bf16.mxu0 0
          %1634 = vmatpush1.bf16.msra.mxu0 0
          %1635 = vmatprep.subr.bf16.mxu0 0
          %1636 = vmatpush1.bf16.msra.mxu0 0
          %1637 = vmatprep.subr.bf16.mxu0 0
          %1638 = vmatpush1.bf16.msra.mxu0 0
          %1639 = vmatprep.subr.bf16.mxu0 0
          %1640 = vmatpush1.bf16.msra.mxu0 0
          %1641 = vmatprep.subr.bf16.mxu0 0
          %1642 = vmatpush1.bf16.msra.mxu0 0
          %1643 = vmatprep.subr.bf16.mxu0 0
          %1644 = vmatpush1.bf16.msra.mxu0 0
          %1645 = vmatprep.subr.bf16.mxu0 0
          %1646 = vmatpush1.bf16.msra.mxu0 0
          %1647 = vmatprep.subr.bf16.mxu0 0
          %1648 = vmatpush1.bf16.msra.mxu0 0
          %1649 = vmatprep.subr.bf16.mxu0 0
          %1650 = vmatpush1.bf16.msra.mxu0 0
          %1651 = vmatprep.subr.bf16.mxu0 0
          %1652 = vmatpush1.bf16.msra.mxu0 0
          %1653 = vmatprep.subr.bf16.mxu0 0
          %1654 = vmatpush1.bf16.msra.mxu0 0
          %1655 = vmatprep.mubr.bf16.mxu0 0
          %1656 = vmatmul.mubr.bf16.gmra.mrb[0].mxu0 %v1618
          %v1657 = vpop.f32.mrb[0].mxu0
          %v1658 = vadd.f32 0.0, %v1657
          %v1659 = vpop.f32.mrb[0].mxu0
          %v1660 = vpop.f32.mrb[0].mxu0
          %v1661 = vpop.f32.mrb[0].mxu0
          %1662 = vdwg.mxu0
          %v1663 = vrcp.pop %v1460
          %v1664 = vrcp.pop %v1463
          %v1665 = vrcp.pop %v1466
          %v1666 = vrcp.pop %v1469
          %v1667 = vmul.f32 %v1520, %v1663
          %v1668 = vmul.f32 %v1566, %v1664
          %v1669 = vmul.f32 %v1612, %v1665
          %v1670 = vmul.f32 %v1658, %v1666
          %v1671 = vpack.c.bf16 %v1667, %v1667
          %v1672 = vpack.c.bf16 %v1668, %v1668
          %v1673 = vpack.c.bf16 %v1669, %v1669
          %v1674 = vpack.c.bf16 %v1670, %v1670
          %v1675 = vld [vmem:[%s6] sm:$0xf]
          %s1676 = scalar_lea.vmem %s6, 4
          %v1677 = vld [vmem:[%s1676] sm:$0xf]
          %v1679 = vsel %vm1249, %v1672, 0
          %v1682 = vsel %vm1481, %v1677, 0
          %1684 = vmatprep.subr.bf16.mxu0 0
          %1685 = vmatpush1.bf16.msra.mxu0 %v1682
          %1686 = vmatprep.subr.bf16.mxu0 0
          %1687 = vmatpush1.bf16.msra.mxu0 0
          %1688 = vmatprep.subr.bf16.mxu0 0
          %1689 = vmatpush1.bf16.msra.mxu0 0
          %1690 = vmatprep.subr.bf16.mxu0 0
          %1691 = vmatpush1.bf16.msra.mxu0 0
          %1692 = vmatprep.subr.bf16.mxu0 0
          %1693 = vmatpush1.bf16.msra.mxu0 0
          %1694 = vmatprep.subr.bf16.mxu0 0
          %1695 = vmatpush1.bf16.msra.mxu0 0
          %1696 = vmatprep.subr.bf16.mxu0 0
          %1697 = vmatpush1.bf16.msra.mxu0 0
          %1698 = vmatprep.subr.bf16.mxu0 0
          %1699 = vmatpush1.bf16.msra.mxu0 0
          %1700 = vmatprep.subr.bf16.mxu0 0
          %1701 = vmatpush1.bf16.msra.mxu0 0
          %1702 = vmatprep.subr.bf16.mxu0 0
          %1703 = vmatpush1.bf16.msra.mxu0 0
          %1704 = vmatprep.subr.bf16.mxu0 0
          %1705 = vmatpush1.bf16.msra.mxu0 0
          %1706 = vmatprep.subr.bf16.mxu0 0
          %1707 = vmatpush1.bf16.msra.mxu0 0
          %1708 = vmatprep.subr.bf16.mxu0 0
          %1709 = vmatpush1.bf16.msra.mxu0 0
          %1710 = vmatprep.subr.bf16.mxu0 0
          %1711 = vmatpush1.bf16.msra.mxu0 0
          %1712 = vmatprep.subr.bf16.mxu0 0
          %1713 = vmatpush1.bf16.msra.mxu0 0
          %1714 = vmatprep.subr.bf16.mxu0 0
          %1715 = vmatpush1.bf16.msra.mxu0 0
          %1716 = vmatprep.mubr.bf16.mxu0 0
          %1717 = vmatmul.mubr.bf16.gmra.mrb[0].mxu0 %v1679
          %v1718 = vpop.f32.mrb[0].mxu0
          %v1719 = vadd.f32 0.0, %v1718
          %v1720 = vpop.f32.mrb[0].mxu0
          %v1721 = vpop.f32.mrb[0].mxu0
          %v1722 = vpop.f32.mrb[0].mxu0
          %1723 = vdwg.mxu0
          %v1725 = vsel %vm1249, %v1671, 0
          %v1728 = vsel %vm1481, %v1675, 0
          %1730 = vmatprep.subr.bf16.mxu0 0
          %1731 = vmatpush1.bf16.msra.mxu0 %v1728
          %1732 = vmatprep.subr.bf16.mxu0 0
          %1733 = vmatpush1.bf16.msra.mxu0 0
          %1734 = vmatprep.subr.bf16.mxu0 0
          %1735 = vmatpush1.bf16.msra.mxu0 0
          %1736 = vmatprep.subr.bf16.mxu0 0
          %1737 = vmatpush1.bf16.msra.mxu0 0
          %1738 = vmatprep.subr.bf16.mxu0 0
          %1739 = vmatpush1.bf16.msra.mxu0 0
          %1740 = vmatprep.subr.bf16.mxu0 0
          %1741 = vmatpush1.bf16.msra.mxu0 0
          %1742 = vmatprep.subr.bf16.mxu0 0
          %1743 = vmatpush1.bf16.msra.mxu0 0
          %1744 = vmatprep.subr.bf16.mxu0 0
          %1745 = vmatpush1.bf16.msra.mxu0 0
          %1746 = vmatprep.subr.bf16.mxu0 0
          %1747 = vmatpush1.bf16.msra.mxu0 0
          %1748 = vmatprep.subr.bf16.mxu0 0
          %1749 = vmatpush1.bf16.msra.mxu0 0
          %1750 = vmatprep.subr.bf16.mxu0 0
          %1751 = vmatpush1.bf16.msra.mxu0 0
          %1752 = vmatprep.subr.bf16.mxu0 0
          %1753 = vmatpush1.bf16.msra.mxu0 0
          %1754 = vmatprep.subr.bf16.mxu0 0
          %1755 = vmatpush1.bf16.msra.mxu0 0
          %1756 = vmatprep.subr.bf16.mxu0 0
          %1757 = vmatpush1.bf16.msra.mxu0 0
          %1758 = vmatprep.subr.bf16.mxu0 0
          %1759 = vmatpush1.bf16.msra.mxu0 0
          %1760 = vmatprep.subr.bf16.mxu0 0
          %1761 = vmatpush1.bf16.msra.mxu0 0
          %1762 = vmatprep.mubr.bf16.mxu0 0
          %1763 = vmatmul.mubr.bf16.gmra.mrb[0].mxu0 %v1725
          %v1764 = vpop.f32.mrb[0].mxu0
          %v1765 = vadd.f32 %v1719, %v1764
          %v1766 = vpop.f32.mrb[0].mxu0
          %v1767 = vpop.f32.mrb[0].mxu0
          %v1768 = vpop.f32.mrb[0].mxu0
          %1769 = vdwg.mxu0
          %s1770 = scalar_lea.vmem %s6, 8
          %v1771 = vld [vmem:[%s1770] sm:$0xf]
          %v1773 = vsel %vm1249, %v1673, 0
          %v1776 = vsel %vm1481, %v1771, 0
          %1778 = vmatprep.subr.bf16.mxu0 0
          %1779 = vmatpush1.bf16.msra.mxu0 %v1776
          %1780 = vmatprep.subr.bf16.mxu0 0
          %1781 = vmatpush1.bf16.msra.mxu0 0
          %1782 = vmatprep.subr.bf16.mxu0 0
          %1783 = vmatpush1.bf16.msra.mxu0 0
          %1784 = vmatprep.subr.bf16.mxu0 0
          %1785 = vmatpush1.bf16.msra.mxu0 0
          %1786 = vmatprep.subr.bf16.mxu0 0
          %1787 = vmatpush1.bf16.msra.mxu0 0
          %1788 = vmatprep.subr.bf16.mxu0 0
          %1789 = vmatpush1.bf16.msra.mxu0 0
          %1790 = vmatprep.subr.bf16.mxu0 0
          %1791 = vmatpush1.bf16.msra.mxu0 0
          %1792 = vmatprep.subr.bf16.mxu0 0
          %1793 = vmatpush1.bf16.msra.mxu0 0
          %1794 = vmatprep.subr.bf16.mxu0 0
          %1795 = vmatpush1.bf16.msra.mxu0 0
          %1796 = vmatprep.subr.bf16.mxu0 0
          %1797 = vmatpush1.bf16.msra.mxu0 0
          %1798 = vmatprep.subr.bf16.mxu0 0
          %1799 = vmatpush1.bf16.msra.mxu0 0
          %1800 = vmatprep.subr.bf16.mxu0 0
          %1801 = vmatpush1.bf16.msra.mxu0 0
          %1802 = vmatprep.subr.bf16.mxu0 0
          %1803 = vmatpush1.bf16.msra.mxu0 0
          %1804 = vmatprep.subr.bf16.mxu0 0
          %1805 = vmatpush1.bf16.msra.mxu0 0
          %1806 = vmatprep.subr.bf16.mxu0 0
          %1807 = vmatpush1.bf16.msra.mxu0 0
          %1808 = vmatprep.subr.bf16.mxu0 0
          %1809 = vmatpush1.bf16.msra.mxu0 0
          %1810 = vmatprep.mubr.bf16.mxu0 0
          %1811 = vmatmul.mubr.bf16.gmra.mrb[0].mxu0 %v1773
          %v1812 = vpop.f32.mrb[0].mxu0
          %v1813 = vadd.f32 0.0, %v1812
          %v1814 = vpop.f32.mrb[0].mxu0
          %v1815 = vpop.f32.mrb[0].mxu0
          %v1816 = vpop.f32.mrb[0].mxu0
          %1817 = vdwg.mxu0
          %v1818 = vadd.f32 %v1765, %v1813
          %s1819 = scalar_lea.vmem %s6, 12
          %v1820 = vld [vmem:[%s1819] sm:$0xf]
          %v1822 = vsel %vm1249, %v1674, 0
          %v1825 = vsel %vm1481, %v1820, 0
          %1827 = vmatprep.subr.bf16.mxu0 0
          %1828 = vmatpush1.bf16.msra.mxu0 %v1825
          %1829 = vmatprep.subr.bf16.mxu0 0
          %1830 = vmatpush1.bf16.msra.mxu0 0
          %1831 = vmatprep.subr.bf16.mxu0 0
          %1832 = vmatpush1.bf16.msra.mxu0 0
          %1833 = vmatprep.subr.bf16.mxu0 0
          %1834 = vmatpush1.bf16.msra.mxu0 0
          %1835 = vmatprep.subr.bf16.mxu0 0
          %1836 = vmatpush1.bf16.msra.mxu0 0
          %1837 = vmatprep.subr.bf16.mxu0 0
          %1838 = vmatpush1.bf16.msra.mxu0 0
          %1839 = vmatprep.subr.bf16.mxu0 0
          %1840 = vmatpush1.bf16.msra.mxu0 0
          %1841 = vmatprep.subr.bf16.mxu0 0
          %1842 = vmatpush1.bf16.msra.mxu0 0
          %1843 = vmatprep.subr.bf16.mxu0 0
          %1844 = vmatpush1.bf16.msra.mxu0 0
          %1845 = vmatprep.subr.bf16.mxu0 0
          %1846 = vmatpush1.bf16.msra.mxu0 0
          %1847 = vmatprep.subr.bf16.mxu0 0
          %1848 = vmatpush1.bf16.msra.mxu0 0
          %1849 = vmatprep.subr.bf16.mxu0 0
          %1850 = vmatpush1.bf16.msra.mxu0 0
          %1851 = vmatprep.subr.bf16.mxu0 0
          %1852 = vmatpush1.bf16.msra.mxu0 0
          %1853 = vmatprep.subr.bf16.mxu0 0
          %1854 = vmatpush1.bf16.msra.mxu0 0
          %1855 = vmatprep.subr.bf16.mxu0 0
          %1856 = vmatpush1.bf16.msra.mxu0 0
          %1857 = vmatprep.subr.bf16.mxu0 0
          %1858 = vmatpush1.bf16.msra.mxu0 0
          %1859 = vmatprep.mubr.bf16.mxu0 0
          %1860 = vmatmul.mubr.bf16.gmra.mrb[0].mxu0 %v1822
          %v1861 = vpop.f32.mrb[0].mxu0
          %v1862 = vadd.f32 0.0, %v1861
          %v1863 = vpop.f32.mrb[0].mxu0
          %v1864 = vpop.f32.mrb[0].mxu0
          %v1865 = vpop.f32.mrb[0].mxu0
          %1866 = vdwg.mxu0
          %v1867 = vadd.f32 %v1818, %v1862
          %v1868 = vld [vmem:[%s7] sm:$0x1]
          %v1870 = vlaneseq
          %v1871 = vshrl.u32 %v1870, 7
          %v1872 = vsub.s32 0, %v1871
          %v1873 = vrot.slane %v1868, %v1872
          %v1875 = vadd.f32 %v1867, %v1873
          %v1876 = vadd.f32 %v533, %v1875
          %v1877 = vld [vmem:[%s8] sm:$0x1]
          %v1878 = vld [vmem:[%s9] sm:$0x1]
          %v1879 = vsel %vm536, %v1876, 0.0
          %1880 = vadd.xlane.f32.xlu0 %v1879
          %v1881 = vpop.xlane.xlu0 %1880
          %v1882 = vmul.f32 %v1881, %v540
          %v1883 = vsub.f32 %v1876, %v1882
          %v1884 = vmul.f32 %v1883, %v1883
          %v1885 = vsel %vm536, %v1884, 0.0
          %1886 = vadd.xlane.f32.xlu0 %v1885
          %v1887 = vpop.xlane.xlu0 %1886
          %v1888 = vmul.f32 %v1887, %v540
          %v1889 = vadd.f32 %v1888, 1e-05
          %v1890 = vrsqrt.pop %v1889
          %v1891 = vmul.f32 %v1883, %v1890
          %v1893 = vlaneseq
          %v1894 = vshrl.u32 %v1893, 7
          %v1895 = vsub.s32 0, %v1894
          %v1896 = vrot.slane %v1877, %v1895
          %v1898 = vmul.f32 %v1891, %v1896
          %v1900 = vlaneseq
          %v1901 = vshrl.u32 %v1900, 7
          %v1902 = vsub.s32 0, %v1901
          %v1903 = vrot.slane %v1878, %v1902
          %v1905 = vadd.f32 %v1898, %v1903
          %1906 = vst.msk [vmem:[#allocation2] sm:$0xff] %vm536, %v1905
        $region80: #{tpu_custom_call.1} parent=75 // pred_fallthru
          _
        %v1907 = vld [vmem:[#allocation2] sm:$0xff]
        %v1908 = vpack.c.bf16 %v1907, %v1907
        %v1909 = vld [vmem:[%s518] sm:$0xf]
        %v1910 = vld [vmem:[%s518 + $0x4] sm:$0xf]
        %v1911 = vld [vmem:[%s518 + $0x8] sm:$0xf]
        %v1912 = vld [vmem:[%s518 + $0xc] sm:$0xf]
        %v1913 = vld [vmem:[%s521] sm:$0x1]
        %v1915 = vlaneseq
        %v1916 = vshrl.u32 %v1915, 7
        %v1917 = vsub.s32 0, %v1916
        %v1918 = vrot.slane %v1913, %v1917
        %v1924 = vunpack.c.l.b16 %v1909
        %v1925 = vunpack.c.l.b16 %v1910
        %v1926 = vunpack.c.l.b16 %v1911
        %v1927 = vunpack.c.l.b16 %v1912
        %v1928 = vpack.c.b16 %v1925, %v1924
        %v1929 = vpack.c.b16 %v1927, %v1926
        %vm1932 = vcmask 261120
        %v1934 = vsel %vm1932, %v1908, 0
        %1936 = vmatprep.subr.bf16.mxu0 0
        %1937 = vmatpush1.bf16.msra.mxu0 %v1928
        %1938 = vmatprep.subr.bf16.mxu0 0
        %1939 = vmatpush1.bf16.msra.mxu0 %v1929
        %1940 = vmatprep.subr.bf16.mxu0 0
        %1941 = vmatpush1.bf16.msra.mxu0 0
        %1942 = vmatprep.subr.bf16.mxu0 0
        %1943 = vmatpush1.bf16.msra.mxu0 0
        %1944 = vmatprep.subr.bf16.mxu0 0
        %1945 = vmatpush1.bf16.msra.mxu0 0
        %1946 = vmatprep.subr.bf16.mxu0 0
        %1947 = vmatpush1.bf16.msra.mxu0 0
        %1948 = vmatprep.subr.bf16.mxu0 0
        %1949 = vmatpush1.bf16.msra.mxu0 0
        %1950 = vmatprep.subr.bf16.mxu0 0
        %1951 = vmatpush1.bf16.msra.mxu0 0
        %1952 = vmatprep.subr.bf16.mxu0 0
        %1953 = vmatpush1.bf16.msra.mxu0 0
        %1954 = vmatprep.subr.bf16.mxu0 0
        %1955 = vmatpush1.bf16.msra.mxu0 0
        %1956 = vmatprep.subr.bf16.mxu0 0
        %1957 = vmatpush1.bf16.msra.mxu0 0
        %1958 = vmatprep.subr.bf16.mxu0 0
        %1959 = vmatpush1.bf16.msra.mxu0 0
        %1960 = vmatprep.subr.bf16.mxu0 0
        %1961 = vmatpush1.bf16.msra.mxu0 0
        %1962 = vmatprep.subr.bf16.mxu0 0
        %1963 = vmatpush1.bf16.msra.mxu0 0
        %1964 = vmatprep.subr.bf16.mxu0 0
        %1965 = vmatpush1.bf16.msra.mxu0 0
        %1966 = vmatprep.subr.bf16.mxu0 0
        %1967 = vmatpush1.bf16.msra.mxu0 0
        %1968 = vmatprep.mubr.bf16.mxu0 0
        %1969 = vmatmul.mubr.bf16.gmra.mrb[0].mxu0 %v1934
        %v1970 = vpop.f32.mrb[0].mxu0
        %v1971 = vadd.f32 %v1918, %v1970
        %v1972 = vpop.f32.mrb[0].mxu0
        %v1973 = vpop.f32.mrb[0].mxu0
        %v1974 = vpop.f32.mrb[0].mxu0
        %1975 = vdwg.mxu0
        %v1976 = vmul.f32 %v1971, %v1971
        %v1977 = vmul.f32 %v1971, %v1976
        %v1978 = vmul.f32 %v1977, 0.044715
        %v1979 = vadd.f32 %v1971, %v1978
        %v1980 = vmul.f32 %v1979, 0.7978846
        %v1981 = vtanh.pop %v1980
        %v1982 = vadd.f32 %v1981, 1.0
        %v1983 = vmul.f32 %v1982, 0.5
        %v1984 = vmul.f32 %v1971, %v1983
        %v1985 = vpack.c.bf16 %v1984, %v1984
        %v1986 = vld [vmem:[%s526] sm:$0xf]
        %v1987 = vld [vmem:[%s526 + $0x4] sm:$0xf]
        %v1988 = vld [vmem:[%s526 + $0x8] sm:$0xf]
        %v1989 = vld [vmem:[%s526 + $0xc] sm:$0xf]
        %v1990 = vld [vmem:[%s526 + $0x10] sm:$0xf]
        %v1991 = vld [vmem:[%s526 + $0x14] sm:$0xf]
        %v1992 = vld [vmem:[%s526 + $0x18] sm:$0xf]
        %v1993 = vld [vmem:[%s526 + $0x1c] sm:$0xf]
        %v2002 = vunpack.c.l.b16 %v1986
        %v2003 = vunpack.c.l.b16 %v1987
        %v2004 = vunpack.c.l.b16 %v1988
        %v2005 = vunpack.c.l.b16 %v1989
        %v2006 = vunpack.c.l.b16 %v1990
        %v2007 = vunpack.c.l.b16 %v1991
        %v2008 = vunpack.c.l.b16 %v1992
        %v2009 = vunpack.c.l.b16 %v1993
        %v2010 = vpack.c.b16 %v2003, %v2002
        %v2011 = vpack.c.b16 %v2005, %v2004
        %v2012 = vpack.c.b16 %v2007, %v2006
        %v2013 = vpack.c.b16 %v2009, %v2008
        %vm2018 = vcmask 523264
        %v2020 = vsel %vm2018, %v1985, 0
        %2022 = vmatprep.subr.bf16.mxu0 0
        %2023 = vmatpush1.bf16.msra.mxu0 %v2010
        %2024 = vmatprep.subr.bf16.mxu0 0
        %2025 = vmatpush1.bf16.msra.mxu0 %v2011
        %2026 = vmatprep.subr.bf16.mxu0 0
        %2027 = vmatpush1.bf16.msra.mxu0 %v2012
        %2028 = vmatprep.subr.bf16.mxu0 0
        %2029 = vmatpush1.bf16.msra.mxu0 %v2013
        %2030 = vmatprep.subr.bf16.mxu0 0
        %2031 = vmatpush1.bf16.msra.mxu0 0
        %2032 = vmatprep.subr.bf16.mxu0 0
        %2033 = vmatpush1.bf16.msra.mxu0 0
        %2034 = vmatprep.subr.bf16.mxu0 0
        %2035 = vmatpush1.bf16.msra.mxu0 0
        %2036 = vmatprep.subr.bf16.mxu0 0
        %2037 = vmatpush1.bf16.msra.mxu0 0
        %2038 = vmatprep.subr.bf16.mxu0 0
        %2039 = vmatpush1.bf16.msra.mxu0 0
        %2040 = vmatprep.subr.bf16.mxu0 0
        %2041 = vmatpush1.bf16.msra.mxu0 0
        %2042 = vmatprep.subr.bf16.mxu0 0
        %2043 = vmatpush1.bf16.msra.mxu0 0
        %2044 = vmatprep.subr.bf16.mxu0 0
        %2045 = vmatpush1.bf16.msra.mxu0 0
        %2046 = vmatprep.subr.bf16.mxu0 0
        %2047 = vmatpush1.bf16.msra.mxu0 0
        %2048 = vmatprep.subr.bf16.mxu0 0
        %2049 = vmatpush1.bf16.msra.mxu0 0
        %2050 = vmatprep.subr.bf16.mxu0 0
        %2051 = vmatpush1.bf16.msra.mxu0 0
        %2052 = vmatprep.subr.bf16.mxu0 0
        %2053 = vmatpush1.bf16.msra.mxu0 0
        %2054 = vmatprep.mubr.bf16.mxu0 0
        %2055 = vmatmul.mubr.bf16.gmra.mrb[0].mxu0 %v2020
        %v2056 = vpop.f32.mrb[0].mxu0
        %v2057 = vadd.f32 0.0, %v2056
        %v2058 = vpop.f32.mrb[0].mxu0
        %v2059 = vpop.f32.mrb[0].mxu0
        %v2060 = vpop.f32.mrb[0].mxu0
        %2061 = vdwg.mxu0
        // Predicated region
        $region81: #{tpu_custom_call.1} parent=75 // pred_check
          %p2062 = pneg %p529
        $region82: #{tpu_custom_call.1} parent=75 // pred_check_branch
          %2064 = sbr.rel (%p2062) target = $region84
        $region83: #{tpu_custom_call.1} parent=75 // pred_region
          %v2065 = vadd.f32 %v1907, %v2057
          %v2066 = vld [vmem:[%s13] sm:$0x1]
          %v2068 = vlaneseq
          %v2069 = vshrl.u32 %v2068, 7
          %v2070 = vsub.s32 0, %v2069
          %v2071 = vrot.slane %v2066, %v2070
          %v2073 = vadd.f32 %v2065, %v2071
          %2074 = vst.msk [vmem:[%s510] sm:$0xff] %vm1932, %v2073
        $region84: #{tpu_custom_call.1} parent=75 // pred_fallthru
          _
        %p2075 = scmp.gt.s32.totalorder %s33, 0
        // Predicated region
        $region85: #{tpu_custom_call.1} parent=75 // pred_check
          %p2076 = pneg %p2075
        $region86: #{tpu_custom_call.1} parent=75 // pred_check_branch
          %2078 = sbr.rel (%p2076) target = $region88
        $region87: #{tpu_custom_call.1} parent=75 // pred_region
          %v2079 = vld [vmem:[%s510] sm:$0xff]
          %v2080 = vadd.f32 %v2079, %v2057
          %2081 = vst.msk [vmem:[%s510] sm:$0xff] %vm1932, %v2080
        $region88: #{tpu_custom_call.1} parent=75 // pred_fallthru
          _
        %s2082 = sand.u32 %s362, 1
        %s2083 = scalar_lea.sflag [#allocation4], %s2082
        %s2084 = sand.u32 %s362, 1
        %s2085 = smul.addr %s2084, 8
        %s2086 = scalar_lea.vmem [#allocation3], %s2085
        // Predicated region
        $region89: #{tpu_custom_call.1} parent=75 // pred_check
          %p2087 = pneg %p372
        $region90: #{tpu_custom_call.1} parent=75 // pred_check_branch
          %2089 = sbr.rel (%p2087) target = $region92
        $region91: #{tpu_custom_call.1} parent=75 // pred_region
          %s2091 = ssub.s32 128, 128
          %2092 = vsyncadd %s2083, %s2091
          %s2093 = smul.addr %s32, 128
          %s2094 = scalar_lea.hbm %s14, %s2093
          %s2096 = sshll.u32 %s2086, 4
          %s2097 = int_to_ptr.vmem [resolvable:$true] %s2096
          %2099 = dma.vmem_to_hbm [thread:$0]  %s2097, 128, %s2094, %s2083
        $region92: #{tpu_custom_call.1} parent=75 // pred_fallthru
          _
      $region76: #{tpu_custom_call.1} parent=5 // pred_fallthru
        _
      %p2100 = scmp.le.s32.totalorder 2, %s23
      // Predicated region
      $region93: #{tpu_custom_call.1} parent=5 // pred_check
        %p2101 = pneg %p2100
      $region94: #{tpu_custom_call.1} parent=5 // pred_check_branch
        %2103 = sbr.rel (%p2101) target = $region96
      $region95: #{tpu_custom_call.1} parent=5 // pred_region
        %s2104 = ssub.s32 %s23, 2
        // Predicated region
        $region97: #{tpu_custom_call.1} parent=95 // pred_check
          %p2105 = pneg %p378
        $region98: #{tpu_custom_call.1} parent=95 // pred_check_branch
          %2107 = sbr.rel (%p2105) target = $region100
        $region99: #{tpu_custom_call.1} parent=95 // pred_region
          %s2108 = sand.u32 %s363, 1
          %s2109 = scalar_lea.sflag [#allocation4], %s2108
          %s2110 = sand.u32 %s363, 1
          %s2111 = smul.addr %s2110, 8
          %s2112 = scalar_lea.vmem [#allocation3], %s2111
          %2113 = dma.done %s2109, 128
        $region100: #{tpu_custom_call.1} parent=95 // pred_fallthru
          _
      $region96: #{tpu_custom_call.1} parent=5 // pred_fallthru
        _
    $region6: #{tpu_custom_call.1} parent=1 // loop_footer
      %s27 = sadd.s32 1, %s23
    $region7: #{tpu_custom_call.1} parent=1 // loop_footer_branch
      %22 = sbr.rel target = $region3
    $region8: #{tpu_custom_call.1} parent=1 // loop_exit
      _
    %2114 = vsyncpa [#allocation4], 1
    %s2115 = scalar_lea.sflag [#allocation4], 1
    %2116 = vsyncpa %s2115, 1

</llo_original>
